<compile_context>
chip_gen: v7x
topology: tpu7x:2x2x1
jax: 0.10.0
libtpu: 0.0.40
codegen_flags: <defaults>
</compile_context>

<pallas_src>
import functools
import math

import jax
import jax.numpy as jnp
from jax.experimental import pallas as pl
from jax.experimental.pallas import tpu as pltpu


def _gmha_kernel(yq_ref, xk_ref, xv_ref,
                 Lx_ref, Ly_ref, bx_ref, by_ref,
                 W_ref, etao_ref,
                 out_ref, *, K, Dp, compute_dtype):
    """One grid step = bt batches x tn queries, all K heads. Grid = (B//bt, N//tn)."""
    bt, tn, Qp = yq_ref.shape
    _, M, Pp = xk_ref.shape
    P = xv_ref.shape[-1]
    Q = out_ref.shape[-1]
    cd = compute_dtype

    # ---- head-batched attention projections: one lane-dense MXU pass each ----
    # Lambda^x / beta^x are pre-scaled by 1/sqrt(D'): softmax temperature folded in.
    xk2 = xk_ref[...].reshape(bt * M, Pp)
    yq2 = yq_ref[...].reshape(bt * tn, Qp)
    xbar = (jnp.dot(xk2, Lx_ref[...], preferred_element_type=jnp.float32)
            + bx_ref[...]).reshape(bt, M, K * Dp).astype(cd)        # (bt, M,  K*D')
    ybar = (jnp.dot(yq2, Ly_ref[...], preferred_element_type=jnp.float32)
            + by_ref[...]).reshape(bt, tn, K * Dp).astype(cd)       # (bt, tn, K*D')

    xv = xv_ref[...]                                                # (bt, M, P)

    # ---- per-head scores / online exp / A.x, accumulated into one f32 buffer ----
    # TODO(synk): at production D' (lane-aligned, >=128) these head slices are free;
    # batch them into one multi-batch dot_general once Mosaic supports >1 batch dim.
    acc = jnp.zeros((bt * tn, Q), jnp.float32)
    for k in range(K):                                 # K is small & static: unrolled
        hd = slice(k * Dp, (k + 1) * Dp)
        # transposed scores (bt, tn, M): softmax over M == lane-axis reduction
        s = jnp.einsum("bnd,bmd->bnm", ybar[..., hd], xbar[..., hd],
                       preferred_element_type=jnp.float32)
        s = s - jnp.max(s, axis=-1, keepdims=True)
        e = jnp.exp(s)                                              # f32 (EUP)
        l = jnp.sum(e, axis=-1, keepdims=True)                      # (bt, tn, 1)
        # unnormalized A^T x; normalization deferred to the small (tn, P) tensor
        part = jnp.einsum("bnm,bmp->bnp", e.astype(cd), xv,
                          preferred_element_type=jnp.float32)       # (bt, tn, P) f32
        inv_l = pl.reciprocal(l, approx=(cd != jnp.float32))        # EUP slot
        part = part * inv_l
        # fused value+output projection for head k, accumulated (no lane concat)
        acc = acc + jnp.dot(part.reshape(bt * tn, P).astype(cd), W_ref[k],
                            preferred_element_type=jnp.float32)     # (bt*tn, Q)

    out_ref[...] = (acc.reshape(bt, tn, Q) + etao_ref[...]).astype(out_ref.dtype)


def gmha_forward(yq, xkey, xval, params, *, block_b=None, block_n=None,
                 compute_dtype=jnp.bfloat16):
    """yq: (B,N,Q'), xkey: (B,M,P'), xval: (B,M,P)  ->  y: (B,N,Q)."""
    B, N, Qp = yq.shape
    _, M, Pp = xkey.shape
    _, _, P = xval.shape
    Lx, Ly, bx, by = params["Lx"], params["Ly"], params["bx"], params["by"]
    Tx, eta, Ty, etao = params["Tx"], params["eta"], params["Ty"], params["etao"]
    K, _, Dp = Lx.shape
    Q, D = Ty.shape[1], Ty.shape[2]

    # TODO(synk): pad ragged M/N/Q (Q to a multiple of 128 for lane-dense stores).
    assert M % 8 == 0, "M must be a multiple of 8 (pad key length)"
    assert N % 8 == 0, "N must be a multiple of 8 (pad query length)"

    csize = jnp.dtype(compute_dtype).itemsize

    # ---- query-length tiling: keep per-head f32 score tiles small ----
    if block_n is None:
        block_n = N
        while block_n > 8 and block_n % 2 == 0 and block_n * M * 4 * K > (2 << 20):
            block_n //= 2
    tn = block_n
    assert N % tn == 0 and (tn % 8 == 0 or tn == N), "block_n must divide N, multiple of 8"

    # ---- batch blocking: few-MiB input slabs per step, prefer >= 8 grid steps ----
    if block_b is None:
        bytes_per_batch = (M * (Pp + P) + tn * Qp) * csize
        block_b = max(1, min(B, (2 << 20) // max(1, bytes_per_batch)))
        while block_b > 1 and B % block_b != 0:
            block_b -= 1
        while block_b > 1 and (B // block_b) * (N // tn) < 8:
            block_b = max(1, block_b // 2)
            while block_b > 1 and B % block_b != 0:
                block_b -= 1
    bt = block_b
    assert B % bt == 0, "B must be a multiple of block_b"

    inv_temp = 1.0 / math.sqrt(float(Dp))

    # --- host-side parameter folding (all mathematically exact) ---
    Lx_flat = jnp.transpose(Lx, (1, 0, 2)).reshape(Pp, K * Dp) * inv_temp   # (P', K*D')
    Ly_flat = jnp.transpose(Ly, (1, 0, 2)).reshape(Qp, K * Dp)              # (Q', K*D')
    bx_flat = bx.reshape(1, K * Dp) * inv_temp
    by_flat = by.reshape(1, K * Dp)
    W_heads = jnp.einsum("kpd,kqd->kpq", Tx, Ty)                            # (K, P, Q)
    etao_eff = etao.reshape(1, Q) + jnp.einsum("kd,kqd->q", eta.reshape(K, D), Ty)[None, :]

    # matmul operands in compute_dtype; biases and softmax / elementwise math stay f32.
    Lx_flat = Lx_flat.astype(compute_dtype)
    Ly_flat = Ly_flat.astype(compute_dtype)
    W_heads = W_heads.astype(compute_dtype)
    yq_c = yq.astype(compute_dtype)
    xk_c = xkey.astype(compute_dtype)
    xv_c = xval.astype(compute_dtype)

    kernel = functools.partial(_gmha_kernel, K=K, Dp=Dp, compute_dtype=compute_dtype)

    def const_spec(arr):   # grid-invariant full block (DMA'd once, stays VMEM-resident)
        nd = arr.ndim
        # TODO(synk): add pipeline_mode=pl.Buffered(1) at production sizes to drop the
        # second buffer of these grid-invariant blocks (matters for large W on v7x).
        return pl.BlockSpec(arr.shape, lambda b, n, _nd=nd: (0,) * _nd)

    in_specs = [
        pl.BlockSpec((bt, tn, Qp), lambda b, n: (b, n, 0)),   # query slab: tiled over N
        pl.BlockSpec((bt, M, Pp), lambda b, n: (b, 0, 0)),    # key slab: re-used across n
        pl.BlockSpec((bt, M, P), lambda b, n: (b, 0, 0)),     # value slab: re-used across n
        const_spec(Lx_flat), const_spec(Ly_flat),
        const_spec(bx_flat), const_spec(by_flat),
        const_spec(W_heads), const_spec(etao_eff),
    ]
    # TODO(synk): production Q should be padded to a multiple of 128 for lane-dense stores.
    out_spec = pl.BlockSpec((bt, tn, Q), lambda b, n: (b, n, 0))

    # ---- explicit scoped-VMEM budget: real per-step working set with headroom ----
    slab_bytes = (bt * tn * Qp + bt * M * (Pp + P)) * csize + bt * tn * Q * 4
    param_bytes = (Pp * K * Dp + Qp * K * Dp + K * P * Q) * csize + (2 * K * Dp + Q) * 4
    interm_bytes = 4 * (bt * M * K * Dp + bt * tn * K * Dp     # xbar / ybar
                        + 2 * bt * tn * M                      # s / e (one head live)
                        + bt * tn * P + 2 * bt * tn * Q)       # part / acc
    vmem_limit = int(min(100 << 20,
                         max(32 << 20, 2 * (2 * slab_bytes + 2 * param_bytes + interm_bytes))))

    return pl.pallas_call(
        kernel,
        out_shape=jax.ShapeDtypeStruct((B, N, Q), jnp.float32),
        grid_spec=pltpu.PrefetchScalarGridSpec(
            num_scalar_prefetch=0,
            grid=(B // bt, N // tn),
            in_specs=in_specs,
            out_specs=out_spec,
        ),
        compiler_params=pltpu.CompilerParams(
            dimension_semantics=("parallel", "parallel"),
            vmem_limit_bytes=vmem_limit,
        ),
    )(yq_c, xk_c, xv_c, Lx_flat, Ly_flat, bx_flat, by_flat, W_heads, etao_eff)


def gmha_reference(yq, xk, xv, p):
    """Pure-JAX mirror of the torch forward pass (for verification)."""
    Dp = p["Lx"].shape[-1]
    temp = jnp.sqrt(jnp.float32(Dp))
    xbar_a = jnp.einsum("kpd,bmp->bkmd", p["Lx"], xk) + p["bx"][None]
    ybar_a = jnp.einsum("kqd,bnq->bknd", p["Ly"], yq) + p["by"][None]
    score = jnp.einsum("bkmd,bknd->bkmn", xbar_a, ybar_a)
    attn = jax.nn.softmax(score / temp, axis=-2)            # softmax over M
    xbar_v = jnp.einsum("kpd,bmp->bkmd", p["Tx"], xv) + p["eta"][None]
    r = jnp.einsum("bkmn,bkmd->bknd", attn, xbar_v)
    return jnp.einsum("kqd,bknd->bnq", p["Ty"], r) + p["etao"]


def init_params(key, K, P, Q, D, Pp, Qp, Dp):
    ks = jax.random.split(key, 8)
    u = lambda k, shape, s: jax.random.uniform(k, shape, jnp.float32, -s, s)
    return dict(
        Lx=u(ks[0], (K, Pp, Dp), 0.2),     # Lambda^(x)
        Ly=u(ks[1], (K, Qp, Dp), 0.2),     # Lambda^(y)
        bx=u(ks[2], (K, 1, Dp), 0.1),      # beta^(x)
        by=u(ks[3], (K, 1, Dp), 0.1),      # beta^(y)
        Tx=u(ks[4], (K, P, D), 0.2),       # Theta^(x)
        eta=u(ks[5], (K, 1, D), 0.1),      # eta
        Ty=u(ks[6], (K, Q, D), 0.2),       # Theta^(y)
        etao=u(ks[7], (1, 1, Q), 0.1),     # eta^(o)
    )


if __name__ == "__main__":
    key = jax.random.PRNGKey(0)
    B, K = 2, 2
    M, N = 16, 8                 # key length / query length
    P, Pp = 16, 16               # value / key input dims
    Q, Qp = 32, 16               # output / query input dims
    D, Dp = Q // K, Qp // K      # defaults from the module (__init__)

    kp, ky, kx1, kx2 = jax.random.split(key, 4)
    params = init_params(kp, K, P, Q, D, Pp, Qp, Dp)
    yq = jax.random.normal(ky, (B, N, Qp), jnp.float32)   # y'
    xk = jax.random.normal(kx1, (B, M, Pp), jnp.float32)  # x'
    xv = jax.random.normal(kx2, (B, M, P), jnp.float32)   # x

    ref = gmha_reference(yq, xk, xv, params)

    # f32 MXU-input path: tight numerical check against the reference
    out = gmha_forward(yq, xk, xv, params, compute_dtype=jnp.float32)
    jax.block_until_ready(out)
    assert out.shape == (B, N, Q)
    assert jnp.allclose(out, ref, atol=1e-4, rtol=1e-4), float(jnp.max(jnp.abs(out - ref)))

    # bf16 MXU-input path (default; softmax / bias math stays f32): looser tolerance
    out_bf16 = gmha_forward(yq, xk, xv, params, compute_dtype=jnp.bfloat16)
    jax.block_until_ready(out_bf16)
    assert jnp.allclose(out_bf16, ref, atol=1e-1, rtol=1e-1), float(jnp.max(jnp.abs(out_bf16 - ref)))

    print("KERNEL_OK")
</pallas_src>

<mosaic_0001>
module attributes {stable_mosaic.version = 11 : i64} {
  func.func @_gmha_kernel(%arg0: i32, %arg1: i32, %arg2: memref<1x8x16xf32, #tpu.memory_space<vmem>>, %arg3: memref<1x16x16xf32, #tpu.memory_space<vmem>>, %arg4: memref<1x16x16xf32, #tpu.memory_space<vmem>>, %arg5: memref<16x16xf32, #tpu.memory_space<vmem>>, %arg6: memref<16x16xf32, #tpu.memory_space<vmem>>, %arg7: memref<1x16xf32, #tpu.memory_space<vmem>>, %arg8: memref<1x16xf32, #tpu.memory_space<vmem>>, %arg9: memref<2x16x32xf32, #tpu.memory_space<vmem>>, %arg10: memref<1x32xf32, #tpu.memory_space<vmem>>, %arg11: memref<1x8x32xf32, #tpu.memory_space<vmem>>) attributes {dimension_semantics = [#tpu.dimension_semantics<parallel>, #tpu.dimension_semantics<parallel>], iteration_bounds = array<i64: 2, 1>, scalar_prefetch = 0 : i64, scratch_operands = 0 : i64, tpu.core_type = #tpu.core_type<tc>, window_params = [{transform_indices = @transform_0, window_bounds = array<i64: 1, 8, 16>}, {transform_indices = @transform_1, window_bounds = array<i64: 1, 16, 16>}, {transform_indices = @transform_2, window_bounds = array<i64: 1, 16, 16>}, {pipeline_mode = #tpu.pipeline_mode<synchronous>, transform_indices = @transform_3, window_bounds = array<i64: 16, 16>}, {pipeline_mode = #tpu.pipeline_mode<synchronous>, transform_indices = @transform_4, window_bounds = array<i64: 16, 16>}, {pipeline_mode = #tpu.pipeline_mode<synchronous>, transform_indices = @transform_5, window_bounds = array<i64: 1, 16>}, {pipeline_mode = #tpu.pipeline_mode<synchronous>, transform_indices = @transform_6, window_bounds = array<i64: 1, 16>}, {pipeline_mode = #tpu.pipeline_mode<synchronous>, transform_indices = @transform_7, window_bounds = array<i64: 2, 16, 32>}, {pipeline_mode = #tpu.pipeline_mode<synchronous>, transform_indices = @transform_8, window_bounds = array<i64: 1, 32>}, {transform_indices = @transform_9, window_bounds = array<i64: 1, 8, 32>}]} {
    %c0 = arith.constant 0 : index
    %c0_0 = arith.constant 0 : index
    %c0_1 = arith.constant 0 : index
    %0 = vector.load %arg3[%c0, %c0_0, %c0_1] : memref<1x16x16xf32, #tpu.memory_space<vmem>>, vector<1x16x16xf32>
    %1 = vector.shape_cast %0 : vector<1x16x16xf32> to vector<16x16xf32>
    %c0_2 = arith.constant 0 : index
    %c0_3 = arith.constant 0 : index
    %c0_4 = arith.constant 0 : index
    %2 = vector.load %arg2[%c0_2, %c0_3, %c0_4] : memref<1x8x16xf32, #tpu.memory_space<vmem>>, vector<1x8x16xf32>
    %3 = vector.shape_cast %2 : vector<1x8x16xf32> to vector<8x16xf32>
    %c0_5 = arith.constant 0 : index
    %c0_6 = arith.constant 0 : index
    %4 = vector.load %arg5[%c0_5, %c0_6] : memref<16x16xf32, #tpu.memory_space<vmem>>, vector<16x16xf32>
    %cst = arith.constant dense<0.000000e+00> : vector<16x16xf32>
    %5 = tpu.matmul %1, %4, %cst {dimension_numbers = #tpu.dot_dimension_numbers<[1], [0], [0], [1], [0, 0, 1, 1], [], []>} : vector<16x16xf32>, vector<16x16xf32>, vector<16x16xf32> -> vector<16x16xf32>
    %c0_7 = arith.constant 0 : index
    %c0_8 = arith.constant 0 : index
    %6 = vector.load %arg7[%c0_7, %c0_8] : memref<1x16xf32, #tpu.memory_space<vmem>>, vector<1x16xf32>
    %7 = vector.broadcast %6 : vector<1x16xf32> to vector<16x16xf32>
    %8 = arith.addf %5, %7 : vector<16x16xf32>
    %9 = vector.shape_cast %8 : vector<16x16xf32> to vector<1x16x16xf32>
    %c0_9 = arith.constant 0 : index
    %c0_10 = arith.constant 0 : index
    %10 = vector.load %arg6[%c0_9, %c0_10] : memref<16x16xf32, #tpu.memory_space<vmem>>, vector<16x16xf32>
    %cst_11 = arith.constant dense<0.000000e+00> : vector<8x16xf32>
    %11 = tpu.matmul %3, %10, %cst_11 {dimension_numbers = #tpu.dot_dimension_numbers<[1], [0], [0], [1], [0, 0, 1, 1], [], []>} : vector<8x16xf32>, vector<16x16xf32>, vector<8x16xf32> -> vector<8x16xf32>
    %c0_12 = arith.constant 0 : index
    %c0_13 = arith.constant 0 : index
    %12 = vector.load %arg8[%c0_12, %c0_13] : memref<1x16xf32, #tpu.memory_space<vmem>>, vector<1x16xf32>
    %13 = vector.broadcast %12 : vector<1x16xf32> to vector<8x16xf32>
    %14 = arith.addf %11, %13 : vector<8x16xf32>
    %15 = vector.shape_cast %14 : vector<8x16xf32> to vector<1x8x16xf32>
    %c0_14 = arith.constant 0 : index
    %c0_15 = arith.constant 0 : index
    %c0_16 = arith.constant 0 : index
    %16 = vector.load %arg4[%c0_14, %c0_15, %c0_16] : memref<1x16x16xf32, #tpu.memory_space<vmem>>, vector<1x16x16xf32>
    %cst_17 = arith.constant 0.000000e+00 : f32
    %17 = vector.broadcast %cst_17 : f32 to vector<8x32xf32>
    %18 = vector.extract_strided_slice %15 {offsets = [0, 0, 0], sizes = [1, 8, 8], strides = [1, 1, 1]} : vector<1x8x16xf32> to vector<1x8x8xf32>
    %19 = vector.extract_strided_slice %9 {offsets = [0, 0, 0], sizes = [1, 16, 8], strides = [1, 1, 1]} : vector<1x16x16xf32> to vector<1x16x8xf32>
    "tpu.trace_start"() <{level = 10 : i32, message = "bnd,bmd->bnm"}> : () -> ()
    %cst_18 = arith.constant dense<0.000000e+00> : vector<1x8x16xf32>
    %20 = tpu.matmul %18, %19, %cst_18 {dimension_numbers = #tpu.dot_dimension_numbers<[2], [2], [1], [1], [0, 0, 0, 1, 1, 1], [0], [0]>} : vector<1x8x8xf32>, vector<1x16x8xf32>, vector<1x8x16xf32> -> vector<1x8x16xf32>
    "tpu.trace_stop"() : () -> ()
    %cst_19 = arith.constant dense<0xFF800000> : vector<1x8xf32>
    %21 = vector.multi_reduction <maximumf>, %20, %cst_19 [2] : vector<1x8x16xf32> to vector<1x8xf32>
    %22 = vector.shape_cast %21 : vector<1x8xf32> to vector<1x8x1xf32>
    %23 = vector.broadcast %22 : vector<1x8x1xf32> to vector<1x8x16xf32>
    %24 = arith.subf %20, %23 : vector<1x8x16xf32>
    %25 = math.exp %24 : vector<1x8x16xf32>
    %cst_20 = arith.constant dense<0.000000e+00> : vector<1x8xf32>
    %26 = vector.multi_reduction <add>, %25, %cst_20 [2] : vector<1x8x16xf32> to vector<1x8xf32>
    %27 = vector.shape_cast %26 : vector<1x8xf32> to vector<1x8x1xf32>
    "tpu.trace_start"() <{level = 10 : i32, message = "bnm,bmp->bnp"}> : () -> ()
    %cst_21 = arith.constant dense<0.000000e+00> : vector<1x8x16xf32>
    %28 = tpu.matmul %25, %16, %cst_21 {dimension_numbers = #tpu.dot_dimension_numbers<[2], [1], [1], [2], [0, 0, 0, 1, 1, 2], [0], [0]>} : vector<1x8x16xf32>, vector<1x16x16xf32>, vector<1x8x16xf32> -> vector<1x8x16xf32>
    "tpu.trace_stop"() : () -> ()
    %29 = tpu.reciprocal %27 : vector<1x8x1xf32> -> vector<1x8x1xf32>
    %30 = vector.broadcast %29 : vector<1x8x1xf32> to vector<1x8x16xf32>
    %31 = arith.mulf %28, %30 : vector<1x8x16xf32>
    %32 = vector.shape_cast %31 : vector<1x8x16xf32> to vector<8x16xf32>
    %c0_22 = arith.constant 0 : index
    %c0_23 = arith.constant 0 : index
    %c0_24 = arith.constant 0 : index
    %33 = vector.load %arg9[%c0_22, %c0_23, %c0_24] : memref<2x16x32xf32, #tpu.memory_space<vmem>>, vector<1x16x32xf32>
    %34 = vector.shape_cast %33 : vector<1x16x32xf32> to vector<16x32xf32>
    %cst_25 = arith.constant dense<0.000000e+00> : vector<8x32xf32>
    %35 = tpu.matmul %32, %34, %cst_25 {dimension_numbers = #tpu.dot_dimension_numbers<[1], [0], [0], [1], [0, 0, 1, 1], [], []>} : vector<8x16xf32>, vector<16x32xf32>, vector<8x32xf32> -> vector<8x32xf32>
    %36 = arith.addf %17, %35 : vector<8x32xf32>
    %37 = vector.extract_strided_slice %15 {offsets = [0, 0, 8], sizes = [1, 8, 8], strides = [1, 1, 1]} : vector<1x8x16xf32> to vector<1x8x8xf32>
    %38 = vector.extract_strided_slice %9 {offsets = [0, 0, 8], sizes = [1, 16, 8], strides = [1, 1, 1]} : vector<1x16x16xf32> to vector<1x16x8xf32>
    "tpu.trace_start"() <{level = 10 : i32, message = "bnd,bmd->bnm"}> : () -> ()
    %cst_26 = arith.constant dense<0.000000e+00> : vector<1x8x16xf32>
    %39 = tpu.matmul %37, %38, %cst_26 {dimension_numbers = #tpu.dot_dimension_numbers<[2], [2], [1], [1], [0, 0, 0, 1, 1, 1], [0], [0]>} : vector<1x8x8xf32>, vector<1x16x8xf32>, vector<1x8x16xf32> -> vector<1x8x16xf32>
    "tpu.trace_stop"() : () -> ()
    %cst_27 = arith.constant dense<0xFF800000> : vector<1x8xf32>
    %40 = vector.multi_reduction <maximumf>, %39, %cst_27 [2] : vector<1x8x16xf32> to vector<1x8xf32>
    %41 = vector.shape_cast %40 : vector<1x8xf32> to vector<1x8x1xf32>
    %42 = vector.broadcast %41 : vector<1x8x1xf32> to vector<1x8x16xf32>
    %43 = arith.subf %39, %42 : vector<1x8x16xf32>
    %44 = math.exp %43 : vector<1x8x16xf32>
    %cst_28 = arith.constant dense<0.000000e+00> : vector<1x8xf32>
    %45 = vector.multi_reduction <add>, %44, %cst_28 [2] : vector<1x8x16xf32> to vector<1x8xf32>
    %46 = vector.shape_cast %45 : vector<1x8xf32> to vector<1x8x1xf32>
    "tpu.trace_start"() <{level = 10 : i32, message = "bnm,bmp->bnp"}> : () -> ()
    %cst_29 = arith.constant dense<0.000000e+00> : vector<1x8x16xf32>
    %47 = tpu.matmul %44, %16, %cst_29 {dimension_numbers = #tpu.dot_dimension_numbers<[2], [1], [1], [2], [0, 0, 0, 1, 1, 2], [0], [0]>} : vector<1x8x16xf32>, vector<1x16x16xf32>, vector<1x8x16xf32> -> vector<1x8x16xf32>
    "tpu.trace_stop"() : () -> ()
    %48 = tpu.reciprocal %46 : vector<1x8x1xf32> -> vector<1x8x1xf32>
    %49 = vector.broadcast %48 : vector<1x8x1xf32> to vector<1x8x16xf32>
    %50 = arith.mulf %47, %49 : vector<1x8x16xf32>
    %51 = vector.shape_cast %50 : vector<1x8x16xf32> to vector<8x16xf32>
    %c1 = arith.constant 1 : index
    %c0_30 = arith.constant 0 : index
    %c0_31 = arith.constant 0 : index
    %52 = vector.load %arg9[%c1, %c0_30, %c0_31] : memref<2x16x32xf32, #tpu.memory_space<vmem>>, vector<1x16x32xf32>
    %53 = vector.shape_cast %52 : vector<1x16x32xf32> to vector<16x32xf32>
    %cst_32 = arith.constant dense<0.000000e+00> : vector<8x32xf32>
    %54 = tpu.matmul %51, %53, %cst_32 {dimension_numbers = #tpu.dot_dimension_numbers<[1], [0], [0], [1], [0, 0, 1, 1], [], []>} : vector<8x16xf32>, vector<16x32xf32>, vector<8x32xf32> -> vector<8x32xf32>
    %55 = arith.addf %36, %54 : vector<8x32xf32>
    %56 = vector.shape_cast %55 : vector<8x32xf32> to vector<1x8x32xf32>
    %c0_33 = arith.constant 0 : index
    %c0_34 = arith.constant 0 : index
    %57 = vector.load %arg10[%c0_33, %c0_34] : memref<1x32xf32, #tpu.memory_space<vmem>>, vector<1x32xf32>
    %58 = vector.shape_cast %57 : vector<1x32xf32> to vector<1x1x32xf32>
    %59 = vector.broadcast %58 : vector<1x1x32xf32> to vector<1x8x32xf32>
    %60 = arith.addf %56, %59 : vector<1x8x32xf32>
    %c0_35 = arith.constant 0 : index
    %c0_36 = arith.constant 0 : index
    %c0_37 = arith.constant 0 : index
    %61 = vector.load %arg11[%c0_35, %c0_36, %c0_37] : memref<1x8x32xf32, #tpu.memory_space<vmem>>, vector<1x8x32xf32>
    tpu.vector_store %arg11[%c0_35, %c0_36, %c0_37], %60 {strides = array<i32>} : memref<1x8x32xf32, #tpu.memory_space<vmem>>, vector<1x8x32xf32>,
    return
  }
  func.func @transform_0(%arg0: i32, %arg1: i32) -> (i32, i32, i32) {
    %c0_i32 = arith.constant 0 : i32
    %c0_i32_0 = arith.constant 0 : i32
    return %arg0, %arg1, %c0_i32 : i32, i32, i32
  }
  func.func @transform_1(%arg0: i32, %arg1: i32) -> (i32, i32, i32) {
    %c0_i32 = arith.constant 0 : i32
    %c0_i32_0 = arith.constant 0 : i32
    %c0_i32_1 = arith.constant 0 : i32
    return %arg0, %c0_i32, %c0_i32_0 : i32, i32, i32
  }
  func.func @transform_2(%arg0: i32, %arg1: i32) -> (i32, i32, i32) {
    %c0_i32 = arith.constant 0 : i32
    %c0_i32_0 = arith.constant 0 : i32
    %c0_i32_1 = arith.constant 0 : i32
    return %arg0, %c0_i32, %c0_i32_0 : i32, i32, i32
  }
  func.func @transform_3(%arg0: i32, %arg1: i32) -> (i32, i32) {
    %c0_i32 = arith.constant 0 : i32
    %c0_i32_0 = arith.constant 0 : i32
    %c0_i32_1 = arith.constant 0 : i32
    return %c0_i32, %c0_i32_0 : i32, i32
  }
  func.func @transform_4(%arg0: i32, %arg1: i32) -> (i32, i32) {
    %c0_i32 = arith.constant 0 : i32
    %c0_i32_0 = arith.constant 0 : i32
    %c0_i32_1 = arith.constant 0 : i32
    return %c0_i32, %c0_i32_0 : i32, i32
  }
  func.func @transform_5(%arg0: i32, %arg1: i32) -> (i32, i32) {
    %c0_i32 = arith.constant 0 : i32
    %c0_i32_0 = arith.constant 0 : i32
    %c0_i32_1 = arith.constant 0 : i32
    return %c0_i32, %c0_i32_0 : i32, i32
  }
  func.func @transform_6(%arg0: i32, %arg1: i32) -> (i32, i32) {
    %c0_i32 = arith.constant 0 : i32
    %c0_i32_0 = arith.constant 0 : i32
    %c0_i32_1 = arith.constant 0 : i32
    return %c0_i32, %c0_i32_0 : i32, i32
  }
  func.func @transform_7(%arg0: i32, %arg1: i32) -> (i32, i32, i32) {
    %c0_i32 = arith.constant 0 : i32
    %c0_i32_0 = arith.constant 0 : i32
    %c0_i32_1 = arith.constant 0 : i32
    %c0_i32_2 = arith.constant 0 : i32
    return %c0_i32, %c0_i32_0, %c0_i32_1 : i32, i32, i32
  }
  func.func @transform_8(%arg0: i32, %arg1: i32) -> (i32, i32) {
    %c0_i32 = arith.constant 0 : i32
    %c0_i32_0 = arith.constant 0 : i32
    %c0_i32_1 = arith.constant 0 : i32
    return %c0_i32, %c0_i32_0 : i32, i32
  }
  func.func @transform_9(%arg0: i32, %arg1: i32) -> (i32, i32, i32) {
    %c0_i32 = arith.constant 0 : i32
    %c0_i32_0 = arith.constant 0 : i32
    return %arg0, %arg1, %c0_i32 : i32, i32, i32
  }
}

</mosaic_0001>

<llo_original>
// kernel: tpu_custom_call.1
$region0: #{tpu_custom_call.1}
  #allocation0 [shape = 'u32[]', space=smem, size = 0x4, offset = 0x4, fixed_abs, tag = 'smem constant byte address 0x4 - core index']
  #allocation1 [shape = 'u32[144,128]{1,0:T(1,128)}', space=vmem, size = 0x12000, scoped, tag = 'internal scratch']
  %s0 = inlined_call_operand.hbm [shape: f32[2,8,16], index: 0, kind: input, shape index: {}]
  %s1 = inlined_call_operand.hbm [shape: f32[2,16,16], index: 1, kind: input, shape index: {}]
  %s2 = inlined_call_operand.hbm [shape: f32[2,16,16], index: 2, kind: input, shape index: {}]
  %s3 = inlined_call_operand.hbm [shape: f32[16,16], index: 3, kind: input, shape index: {}]
  %s4 = inlined_call_operand.hbm [shape: f32[16,16], index: 4, kind: input, shape index: {}]
  %s5 = inlined_call_operand.vmem [shape: f32[1,16], index: 5, kind: input, shape index: {}]
  %s6 = inlined_call_operand.vmem [shape: f32[1,16], index: 6, kind: input, shape index: {}]
  %s7 = inlined_call_operand.hbm [shape: f32[2,16,32], index: 7, kind: input, shape index: {}]
  %s8 = inlined_call_operand.vmem [shape: f32[1,32], index: 8, kind: input, shape index: {}]
  %s9 = inlined_call_operand.hbm [shape: f32[2,8,32], index: 9, kind: output, shape index: {}]
  %s10 = sld [smem:[#allocation0]]
  $region93: #{tpu_custom_call.1} parent=0
    _
  %s12 = ssub.s32 1, %s10
  %s13 = scalar_select 0, %s12, %s10
  $region1: #{tpu_custom_call.1} parent=0
    #allocation2 [shape = 'u8[8192]{0}', space=vmem, size = 0x2000, scoped, tag = 'input window, operand 0']
    #allocation3 [shape = 's32[2]{0}', space=sflag, size = 0x8, scoped, tag = 'scoped memory for tpu_custom_call.1']
    #allocation4 [shape = 's32[2]{0}', space=sflag, size = 0x8, scoped, tag = 'scoped memory for tpu_custom_call.1']
    #allocation5 [shape = 'u8[16384]{0}', space=vmem, size = 0x4000, scoped, tag = 'input window, operand 1']
    #allocation6 [shape = 's32[2]{0}', space=sflag, size = 0x8, scoped, tag = 'scoped memory for tpu_custom_call.1']
    #allocation7 [shape = 'u8[16384]{0}', space=vmem, size = 0x4000, scoped, tag = 'input window, operand 2']
    #allocation8 [shape = 'u8[8192]{0}', space=vmem, size = 0x2000, scoped, tag = 'input window, operand 3, single buffered']
    #allocation9 [shape = 's32[1]{0}', space=sflag, size = 0x4, scoped, tag = 'scoped memory for tpu_custom_call.1']
    #allocation10 [shape = 'u8[8192]{0}', space=vmem, size = 0x2000, scoped, tag = 'input window, operand 4, single buffered']
    #allocation11 [shape = 'u8[16384]{0}', space=vmem, size = 0x4000, scoped, tag = 'input window, operand 7, single buffered']
    #allocation12 [shape = 's32[1]{0}', space=sflag, size = 0x4, scoped, tag = 'scoped memory for tpu_custom_call.1']
    #allocation13 [shape = 'u8[8192]{0}', space=vmem, size = 0x2000, scoped, tag = 'output window, operand 0']
    %14 = vsyncpa [#allocation3], 0
    %s15 = scalar_lea.sflag [#allocation3], 1
    %16 = vsyncpa %s15, 0
    %17 = vsyncpa [#allocation6], 0
    %s18 = scalar_lea.sflag [#allocation6], 1
    %19 = vsyncpa %s18, 0
    %20 = vsyncpa [#allocation9], 0
    %21 = vsyncpa [#allocation12], 0
    %22 = vsyncpa [#allocation4], 0
    %s23 = scalar_lea.sflag [#allocation4], 1
    %24 = vsyncpa %s23, 0
    loop: start=0, step=1, limit=4
    $region2: #{tpu_custom_call.1} parent=1 // loop_pre_header
      _
    $region3: #{tpu_custom_call.1} parent=1 // loop_header
      %s26 = sphi 0, %s30
      %p27 = scmp.ge.s32.totalorder %s26, 4
      %s33 = sphi 0, %s45
      %s34 = sphi 0, %s41
      %s35 = sphi 0, %s33
      %s36 = sphi 0, %s34
      %s37 = sphi 0, %s35
      %s38 = sphi 0, %s36
      %s50 = sphi 0, %s52
      %s53 = sphi 0, %s50
      %s54 = sphi 0, %s53
      %s70 = sphi 0, %s54
      %s76 = sphi 0, %s78
      %s79 = sphi 0, %s76
      %s80 = sphi 0, %s79
      %s96 = sphi 0, %s80
      %s102 = sphi 0, %s104
      %s105 = sphi 0, %s102
      %s106 = sphi 0, %s105
      %s122 = sphi 0, %s106
      %s126 = sphi 0, %s126
      %s128 = sphi 0, %s126
      %s129 = sphi 0, %s128
      %s143 = sphi 0, %s129
      %s147 = sphi 0, %s147
      %s149 = sphi 0, %s147
      %s150 = sphi 0, %s149
      %s164 = sphi 0, %s150
      %s168 = sphi 0, %s168
      %s170 = sphi 0, %s168
      %s171 = sphi 0, %s170
      %s185 = sphi 0, %s171
      %s189 = sphi 0, %s189
      %s191 = sphi 0, %s189
      %s192 = sphi 0, %s191
      %s206 = sphi 0, %s192
      %s210 = sphi 0, %s210
      %s212 = sphi 0, %s210
      %s213 = sphi 0, %s212
      %s227 = sphi 0, %s213
      %s231 = sphi 0, %s231
      %s233 = sphi 0, %s231
      %s234 = sphi 0, %s233
      %s248 = sphi 0, %s234
      %s256 = sphi 0, %s258
      %s259 = sphi 0, %s256
      %s260 = sphi 0, %s259
      %s276 = sphi 0, %s260
    $region4: #{tpu_custom_call.1} parent=1 // loop_header_branch
      %29 = sbr.rel (%p27) target = $region8
    $region5: #{tpu_custom_call.1} parent=1 // loop_body
      %s31 = ssub.s32 %s26, 1
      %s32 = ssub.s32 %s26, 2
      %s39 = sadd.s32 1, %s34
      %p40 = scmp.ge.s32.totalorder %s39, 1
      %s41 = scalar_select %p40, 0, %s39
      %s42 = sadd.s32 1, %s33
      %s43 = scalar_select %p40, %s42, %s33
      %p44 = scmp.ge.s32.totalorder %s43, 2
      %s45 = scalar_select %p44, 0, %s43
      %s46 = ssub.s32 %s33, %s45
      %s47 = ssub.s32 %s34, %s41
      %s48 = sor.u32 %s46, %s47
      %p49 = scmp.eq.s32.totalorder %s48, 0
      %s51 = sadd.s32 %s50, 1
      %s52 = scalar_select %p49, %s50, %s51
      %p55 = pneg %p49
      %p56 = scmp.eq.s32.totalorder %s26, 1
      %p57 = por %p55, %p56
      %p58 = scmp.ne.s32.totalorder %s50, %s53
      %p59 = scmp.eq.s32.totalorder %s26, 0
      %p60 = por %p58, %p59
      %p61 = scmp.ne.s32.totalorder %s50, %s53
      %p62 = scmp.eq.s32.totalorder %s31, 1
      %p63 = por %p61, %p62
      %p64 = scmp.ne.s32.totalorder %s53, %s54
      %p65 = scmp.eq.s32.totalorder %s31, 0
      %p66 = por %p64, %p65
      %p67 = scmp.ne.s32.totalorder %s53, %s54
      %p68 = scmp.eq.s32.totalorder %s32, 1
      %p69 = por %p67, %p68
      %p71 = scmp.ne.s32.totalorder %s54, %s70
      %p72 = scmp.eq.s32.totalorder %s32, 0
      %p73 = por %p71, %p72
      %s74 = ssub.s32 %s33, %s45
      %p75 = scmp.eq.s32.totalorder %s74, 0
      %s77 = sadd.s32 %s76, 1
      %s78 = scalar_select %p75, %s76, %s77
      %p81 = pneg %p75
      %p82 = scmp.eq.s32.totalorder %s26, 1
      %p83 = por %p81, %p82
      %p84 = scmp.ne.s32.totalorder %s76, %s79
      %p85 = scmp.eq.s32.totalorder %s26, 0
      %p86 = por %p84, %p85
      %p87 = scmp.ne.s32.totalorder %s76, %s79
      %p88 = scmp.eq.s32.totalorder %s31, 1
      %p89 = por %p87, %p88
      %p90 = scmp.ne.s32.totalorder %s79, %s80
      %p91 = scmp.eq.s32.totalorder %s31, 0
      %p92 = por %p90, %p91
      %p93 = scmp.ne.s32.totalorder %s79, %s80
      %p94 = scmp.eq.s32.totalorder %s32, 1
      %p95 = por %p93, %p94
      %p97 = scmp.ne.s32.totalorder %s80, %s96
      %p98 = scmp.eq.s32.totalorder %s32, 0
      %p99 = por %p97, %p98
      %s100 = ssub.s32 %s33, %s45
      %p101 = scmp.eq.s32.totalorder %s100, 0
      %s103 = sadd.s32 %s102, 1
      %s104 = scalar_select %p101, %s102, %s103
      %p107 = pneg %p101
      %p108 = scmp.eq.s32.totalorder %s26, 1
      %p109 = por %p107, %p108
      %p110 = scmp.ne.s32.totalorder %s102, %s105
      %p111 = scmp.eq.s32.totalorder %s26, 0
      %p112 = por %p110, %p111
      %p113 = scmp.ne.s32.totalorder %s102, %s105
      %p114 = scmp.eq.s32.totalorder %s31, 1
      %p115 = por %p113, %p114
      %p116 = scmp.ne.s32.totalorder %s105, %s106
      %p117 = scmp.eq.s32.totalorder %s31, 0
      %p118 = por %p116, %p117
      %p119 = scmp.ne.s32.totalorder %s105, %s106
      %p120 = scmp.eq.s32.totalorder %s32, 1
      %p121 = por %p119, %p120
      %p123 = scmp.ne.s32.totalorder %s106, %s122
      %p124 = scmp.eq.s32.totalorder %s32, 0
      %p125 = por %p123, %p124
      %s127 = sadd.s32 %s126, 1
      %p130 = scmp.eq.s32.totalorder %s26, 1
      %p131 = scmp.ne.s32.totalorder %s126, %s128
      %p132 = scmp.eq.s32.totalorder %s26, 0
      %p133 = por %p131, %p132
      %p134 = scmp.ne.s32.totalorder %s126, %s128
      %p135 = scmp.eq.s32.totalorder %s31, 1
      %p136 = por %p134, %p135
      %p137 = scmp.ne.s32.totalorder %s128, %s129
      %p138 = scmp.eq.s32.totalorder %s31, 0
      %p139 = por %p137, %p138
      %p140 = scmp.ne.s32.totalorder %s128, %s129
      %p141 = scmp.eq.s32.totalorder %s32, 1
      %p142 = por %p140, %p141
      %p144 = scmp.ne.s32.totalorder %s129, %s143
      %p145 = scmp.eq.s32.totalorder %s32, 0
      %p146 = por %p144, %p145
      %s148 = sadd.s32 %s147, 1
      %p151 = scmp.eq.s32.totalorder %s26, 1
      %p152 = scmp.ne.s32.totalorder %s147, %s149
      %p153 = scmp.eq.s32.totalorder %s26, 0
      %p154 = por %p152, %p153
      %p155 = scmp.ne.s32.totalorder %s147, %s149
      %p156 = scmp.eq.s32.totalorder %s31, 1
      %p157 = por %p155, %p156
      %p158 = scmp.ne.s32.totalorder %s149, %s150
      %p159 = scmp.eq.s32.totalorder %s31, 0
      %p160 = por %p158, %p159
      %p161 = scmp.ne.s32.totalorder %s149, %s150
      %p162 = scmp.eq.s32.totalorder %s32, 1
      %p163 = por %p161, %p162
      %p165 = scmp.ne.s32.totalorder %s150, %s164
      %p166 = scmp.eq.s32.totalorder %s32, 0
      %p167 = por %p165, %p166
      %s169 = sadd.s32 %s168, 1
      %p172 = scmp.eq.s32.totalorder %s26, 1
      %p173 = scmp.ne.s32.totalorder %s168, %s170
      %p174 = scmp.eq.s32.totalorder %s26, 0
      %p175 = por %p173, %p174
      %p176 = scmp.ne.s32.totalorder %s168, %s170
      %p177 = scmp.eq.s32.totalorder %s31, 1
      %p178 = por %p176, %p177
      %p179 = scmp.ne.s32.totalorder %s170, %s171
      %p180 = scmp.eq.s32.totalorder %s31, 0
      %p181 = por %p179, %p180
      %p182 = scmp.ne.s32.totalorder %s170, %s171
      %p183 = scmp.eq.s32.totalorder %s32, 1
      %p184 = por %p182, %p183
      %p186 = scmp.ne.s32.totalorder %s171, %s185
      %p187 = scmp.eq.s32.totalorder %s32, 0
      %p188 = por %p186, %p187
      %s190 = sadd.s32 %s189, 1
      %p193 = scmp.eq.s32.totalorder %s26, 1
      %p194 = scmp.ne.s32.totalorder %s189, %s191
      %p195 = scmp.eq.s32.totalorder %s26, 0
      %p196 = por %p194, %p195
      %p197 = scmp.ne.s32.totalorder %s189, %s191
      %p198 = scmp.eq.s32.totalorder %s31, 1
      %p199 = por %p197, %p198
      %p200 = scmp.ne.s32.totalorder %s191, %s192
      %p201 = scmp.eq.s32.totalorder %s31, 0
      %p202 = por %p200, %p201
      %p203 = scmp.ne.s32.totalorder %s191, %s192
      %p204 = scmp.eq.s32.totalorder %s32, 1
      %p205 = por %p203, %p204
      %p207 = scmp.ne.s32.totalorder %s192, %s206
      %p208 = scmp.eq.s32.totalorder %s32, 0
      %p209 = por %p207, %p208
      %s211 = sadd.s32 %s210, 1
      %p214 = scmp.eq.s32.totalorder %s26, 1
      %p215 = scmp.ne.s32.totalorder %s210, %s212
      %p216 = scmp.eq.s32.totalorder %s26, 0
      %p217 = por %p215, %p216
      %p218 = scmp.ne.s32.totalorder %s210, %s212
      %p219 = scmp.eq.s32.totalorder %s31, 1
      %p220 = por %p218, %p219
      %p221 = scmp.ne.s32.totalorder %s212, %s213
      %p222 = scmp.eq.s32.totalorder %s31, 0
      %p223 = por %p221, %p222
      %p224 = scmp.ne.s32.totalorder %s212, %s213
      %p225 = scmp.eq.s32.totalorder %s32, 1
      %p226 = por %p224, %p225
      %p228 = scmp.ne.s32.totalorder %s213, %s227
      %p229 = scmp.eq.s32.totalorder %s32, 0
      %p230 = por %p228, %p229
      %s232 = sadd.s32 %s231, 1
      %p235 = scmp.eq.s32.totalorder %s26, 1
      %p236 = scmp.ne.s32.totalorder %s231, %s233
      %p237 = scmp.eq.s32.totalorder %s26, 0
      %p238 = por %p236, %p237
      %p239 = scmp.ne.s32.totalorder %s231, %s233
      %p240 = scmp.eq.s32.totalorder %s31, 1
      %p241 = por %p239, %p240
      %p242 = scmp.ne.s32.totalorder %s233, %s234
      %p243 = scmp.eq.s32.totalorder %s31, 0
      %p244 = por %p242, %p243
      %p245 = scmp.ne.s32.totalorder %s233, %s234
      %p246 = scmp.eq.s32.totalorder %s32, 1
      %p247 = por %p245, %p246
      %p249 = scmp.ne.s32.totalorder %s234, %s248
      %p250 = scmp.eq.s32.totalorder %s32, 0
      %p251 = por %p249, %p250
      %s252 = ssub.s32 %s33, %s45
      %s253 = ssub.s32 %s34, %s41
      %s254 = sor.u32 %s252, %s253
      %p255 = scmp.eq.s32.totalorder %s254, 0
      %s257 = sadd.s32 %s256, 1
      %s258 = scalar_select %p255, %s256, %s257
      %p261 = pneg %p255
      %p262 = scmp.eq.s32.totalorder %s26, 1
      %p263 = por %p261, %p262
      %p264 = scmp.ne.s32.totalorder %s256, %s259
      %p265 = scmp.eq.s32.totalorder %s26, 0
      %p266 = por %p264, %p265
      %p267 = scmp.ne.s32.totalorder %s256, %s259
      %p268 = scmp.eq.s32.totalorder %s31, 1
      %p269 = por %p267, %p268
      %p270 = scmp.ne.s32.totalorder %s259, %s260
      %p271 = scmp.eq.s32.totalorder %s31, 0
      %p272 = por %p270, %p271
      %p273 = scmp.ne.s32.totalorder %s259, %s260
      %p274 = scmp.eq.s32.totalorder %s32, 1
      %p275 = por %p273, %p274
      %p277 = scmp.ne.s32.totalorder %s260, %s276
      %p278 = scmp.eq.s32.totalorder %s32, 0
      %p279 = por %p277, %p278
      %p280 = scmp.le.s32.totalorder 1, %s26
      %p281 = scmp.lt.s32.totalorder %s26, 3
      %p282 = pnand %p280, %p281
      %p283 = pneg %p282
      // Predicated region
      $region9: #{tpu_custom_call.1} parent=5 // pred_check
        _
      $region10: #{tpu_custom_call.1} parent=5 // pred_check_branch
        %285 = sbr.rel (%p282) target = $region12
      $region11: #{tpu_custom_call.1} parent=5 // pred_region
        %s286 = ssub.s32 %s26, 1
        // Predicated region
        $region13: #{tpu_custom_call.1} parent=11 // pred_check
          %p287 = pneg %p139
        $region14: #{tpu_custom_call.1} parent=11 // pred_check_branch
          %289 = sbr.rel (%p287) target = $region16
        $region15: #{tpu_custom_call.1} parent=11 // pred_region
          %s291 = ssub.s32 256, 256
          %292 = vsyncadd [#allocation9], %s291
          %s293 = sshll.u32 [#allocation8], 4
          %s294 = int_to_ptr.vmem [resolvable:$true] %s293
          %299 = dma.hbm_to_vmem [thread:$0]  %s3, 256, %s294, [#allocation9], 128, 128, 8
        $region16: #{tpu_custom_call.1} parent=11 // pred_fallthru
          _
        // Predicated region
        $region17: #{tpu_custom_call.1} parent=11 // pred_check
          %p300 = pneg %p160
        $region18: #{tpu_custom_call.1} parent=11 // pred_check_branch
          %302 = sbr.rel (%p300) target = $region20
        $region19: #{tpu_custom_call.1} parent=11 // pred_region
          %s304 = ssub.s32 256, 256
          %305 = vsyncadd [#allocation9], %s304
          %s306 = sshll.u32 [#allocation10], 4
          %s307 = int_to_ptr.vmem [resolvable:$true] %s306
          %312 = dma.hbm_to_vmem [thread:$0]  %s4, 256, %s307, [#allocation9], 128, 128, 8
        $region20: #{tpu_custom_call.1} parent=11 // pred_fallthru
          _
        // Predicated region
        $region21: #{tpu_custom_call.1} parent=11 // pred_check
          %p313 = pneg %p181
        $region22: #{tpu_custom_call.1} parent=11 // pred_check_branch
          %315 = sbr.rel (%p313) target = $region24
        $region23: #{tpu_custom_call.1} parent=11 // pred_region
          _
        $region24: #{tpu_custom_call.1} parent=11 // pred_fallthru
          _
        // Predicated region
        $region25: #{tpu_custom_call.1} parent=11 // pred_check
          %p316 = pneg %p202
        $region26: #{tpu_custom_call.1} parent=11 // pred_check_branch
          %318 = sbr.rel (%p316) target = $region28
        $region27: #{tpu_custom_call.1} parent=11 // pred_region
          _
        $region28: #{tpu_custom_call.1} parent=11 // pred_fallthru
          _
        // Predicated region
        $region29: #{tpu_custom_call.1} parent=11 // pred_check
          %p319 = pneg %p223
        $region30: #{tpu_custom_call.1} parent=11 // pred_check_branch
          %321 = sbr.rel (%p319) target = $region32
        $region31: #{tpu_custom_call.1} parent=11 // pred_region
          %s323 = ssub.s32 512, 512
          %324 = vsyncadd [#allocation12], %s323
          %s325 = sshll.u32 [#allocation11], 4
          %s326 = int_to_ptr.vmem [resolvable:$true] %s325
          %331 = dma.hbm_to_vmem [thread:$0]  %s7, 512, %s326, [#allocation12], 128, 128, 8
        $region32: #{tpu_custom_call.1} parent=11 // pred_fallthru
          _
        // Predicated region
        $region33: #{tpu_custom_call.1} parent=11 // pred_check
          %p332 = pneg %p244
        $region34: #{tpu_custom_call.1} parent=11 // pred_check_branch
          %334 = sbr.rel (%p332) target = $region36
        $region35: #{tpu_custom_call.1} parent=11 // pred_region
          _
        $region36: #{tpu_custom_call.1} parent=11 // pred_fallthru
          _
      $region12: #{tpu_custom_call.1} parent=5 // pred_fallthru
        _
      %p335 = scmp.lt.s32.totalorder %s26, 2
      // Predicated region
      $region37: #{tpu_custom_call.1} parent=5 // pred_check
        %p336 = pneg %p335
      $region38: #{tpu_custom_call.1} parent=5 // pred_check_branch
        %338 = sbr.rel (%p336) target = $region40
      $region39: #{tpu_custom_call.1} parent=5 // pred_region
        // Predicated region
        $region41: #{tpu_custom_call.1} parent=39 // pred_check
          %p339 = pneg %p60
        $region42: #{tpu_custom_call.1} parent=39 // pred_check_branch
          %341 = sbr.rel (%p339) target = $region44
        $region43: #{tpu_custom_call.1} parent=39 // pred_region
          %s342 = sand.u32 %s50, 1
          %s343 = scalar_lea.sflag [#allocation3], %s342
          %s344 = sand.u32 %s50, 1
          %s345 = smul.addr %s344, 8
          %s346 = scalar_lea.vmem [#allocation2], %s345
          %s348 = ssub.s32 128, 128
          %349 = vsyncadd %s343, %s348
          %s350 = sadd.s32 %s34, %s33
          %s351 = smul.addr %s350, 128
          %s352 = scalar_lea.hbm %s0, %s351
          %s354 = sshll.u32 %s346, 4
          %s355 = int_to_ptr.vmem [resolvable:$true] %s354
          %357 = dma.hbm_to_vmem [thread:$0]  %s352, 128, %s355, %s343
        $region44: #{tpu_custom_call.1} parent=39 // pred_fallthru
          _
        // Predicated region
        $region45: #{tpu_custom_call.1} parent=39 // pred_check
          %p358 = pneg %p86
        $region46: #{tpu_custom_call.1} parent=39 // pred_check_branch
          %360 = sbr.rel (%p358) target = $region48
        $region47: #{tpu_custom_call.1} parent=39 // pred_region
          %s361 = sand.u32 %s26, 1
          %s362 = scalar_lea.sflag [#allocation6], %s361
          %s363 = sand.u32 %s76, 1
          %s364 = smul.addr %s363, 16
          %s365 = scalar_lea.vmem [#allocation5], %s364
          %s367 = ssub.s32 256, 256
          %368 = vsyncadd %s362, %s367
          %s369 = smul.addr %s33, 2
          %s370 = smul.addr %s369, 128
          %s371 = scalar_lea.hbm %s1, %s370
          %s372 = sshll.u32 %s365, 4
          %s373 = int_to_ptr.vmem [resolvable:$true] %s372
          %378 = dma.hbm_to_vmem [thread:$0]  %s371, 256, %s373, %s362, 128, 128, 8
        $region48: #{tpu_custom_call.1} parent=39 // pred_fallthru
          _
        // Predicated region
        $region49: #{tpu_custom_call.1} parent=39 // pred_check
          %p379 = pneg %p112
        $region50: #{tpu_custom_call.1} parent=39 // pred_check_branch
          %381 = sbr.rel (%p379) target = $region52
        $region51: #{tpu_custom_call.1} parent=39 // pred_region
          %s382 = sand.u32 %s26, 1
          %s383 = scalar_lea.sflag [#allocation6], %s382
          %s384 = sand.u32 %s102, 1
          %s385 = smul.addr %s384, 16
          %s386 = scalar_lea.vmem [#allocation7], %s385
          %s388 = ssub.s32 256, 256
          %389 = vsyncadd %s383, %s388
          %s390 = smul.addr %s33, 2
          %s391 = smul.addr %s390, 128
          %s392 = scalar_lea.hbm %s2, %s391
          %s393 = sshll.u32 %s386, 4
          %s394 = int_to_ptr.vmem [resolvable:$true] %s393
          %399 = dma.hbm_to_vmem [thread:$0]  %s392, 256, %s394, %s383, 128, 128, 8
        $region52: #{tpu_custom_call.1} parent=39 // pred_fallthru
          _
      $region40: #{tpu_custom_call.1} parent=5 // pred_fallthru
        _
      %p400 = scmp.le.s32.totalorder 1, %s26
      %p401 = scmp.lt.s32.totalorder %s26, 3
      %p402 = pnand %p400, %p401
      %p403 = pneg %p402
      // Predicated region
      $region53: #{tpu_custom_call.1} parent=5 // pred_check
        _
      $region54: #{tpu_custom_call.1} parent=5 // pred_check_branch
        %405 = sbr.rel (%p402) target = $region56
      $region55: #{tpu_custom_call.1} parent=5 // pred_region
        %s406 = ssub.s32 %s26, 1
        %s407 = sand.u32 %s53, 1
        %s408 = scalar_lea.sflag [#allocation3], %s407
        %s409 = sand.u32 %s53, 1
        %s410 = smul.addr %s409, 8
        %s411 = scalar_lea.vmem [#allocation2], %s410
        // Predicated region
        $region57: #{tpu_custom_call.1} parent=55 // pred_check
          %p412 = pneg %p66
        $region58: #{tpu_custom_call.1} parent=55 // pred_check_branch
          %414 = sbr.rel (%p412) target = $region60
        $region59: #{tpu_custom_call.1} parent=55 // pred_region
          %415 = dma.done %s408, 128
        $region60: #{tpu_custom_call.1} parent=55 // pred_fallthru
          _
        %s416 = sand.u32 %s31, 1
        %s417 = scalar_lea.sflag [#allocation6], %s416
        %s418 = sand.u32 %s79, 1
        %s419 = smul.addr %s418, 16
        %s420 = scalar_lea.vmem [#allocation5], %s419
        // Predicated region
        $region61: #{tpu_custom_call.1} parent=55 // pred_check
          %p421 = pneg %p92
        $region62: #{tpu_custom_call.1} parent=55 // pred_check_branch
          %423 = sbr.rel (%p421) target = $region64
        $region63: #{tpu_custom_call.1} parent=55 // pred_region
          %424 = dma.done %s417, 256
        $region64: #{tpu_custom_call.1} parent=55 // pred_fallthru
          _
        %s425 = sand.u32 %s31, 1
        %s426 = scalar_lea.sflag [#allocation6], %s425
        %s427 = sand.u32 %s105, 1
        %s428 = smul.addr %s427, 16
        %s429 = scalar_lea.vmem [#allocation7], %s428
        // Predicated region
        $region65: #{tpu_custom_call.1} parent=55 // pred_check
          %p430 = pneg %p118
        $region66: #{tpu_custom_call.1} parent=55 // pred_check_branch
          %432 = sbr.rel (%p430) target = $region68
        $region67: #{tpu_custom_call.1} parent=55 // pred_region
          %433 = dma.done %s426, 256
        $region68: #{tpu_custom_call.1} parent=55 // pred_fallthru
          _
        // Predicated region
        $region69: #{tpu_custom_call.1} parent=55 // pred_check
          %p434 = pneg %p139
        $region70: #{tpu_custom_call.1} parent=55 // pred_check_branch
          %436 = sbr.rel (%p434) target = $region72
        $region71: #{tpu_custom_call.1} parent=55 // pred_region
          %437 = dma.done [#allocation9], 256
        $region72: #{tpu_custom_call.1} parent=55 // pred_fallthru
          _
        // Predicated region
        $region73: #{tpu_custom_call.1} parent=55 // pred_check
          %p438 = pneg %p160
        $region74: #{tpu_custom_call.1} parent=55 // pred_check_branch
          %440 = sbr.rel (%p438) target = $region76
        $region75: #{tpu_custom_call.1} parent=55 // pred_region
          %441 = dma.done [#allocation9], 256
        $region76: #{tpu_custom_call.1} parent=55 // pred_fallthru
          _
        // Predicated region
        $region77: #{tpu_custom_call.1} parent=55 // pred_check
          %p442 = pneg %p223
        $region78: #{tpu_custom_call.1} parent=55 // pred_check_branch
          %444 = sbr.rel (%p442) target = $region80
        $region79: #{tpu_custom_call.1} parent=55 // pred_region
          %445 = dma.done [#allocation12], 512
        $region80: #{tpu_custom_call.1} parent=55 // pred_fallthru
          _
        %s446 = sand.u32 %s53, 1
        %s447 = scalar_lea.sflag [#allocation3], %s446
        %s448 = sand.u32 %s53, 1
        %s449 = smul.addr %s448, 8
        %s450 = scalar_lea.vmem [#allocation2], %s449
        %p451 = pneg %p66
        %p452 = pneg %p63
        %s453 = sand.u32 %s31, 1
        %s454 = scalar_lea.sflag [#allocation6], %s453
        %s455 = sand.u32 %s79, 1
        %s456 = smul.addr %s455, 16
        %s457 = scalar_lea.vmem [#allocation5], %s456
        %p458 = pneg %p92
        %p459 = pneg %p89
        %s460 = sand.u32 %s31, 1
        %s461 = scalar_lea.sflag [#allocation6], %s460
        %s462 = sand.u32 %s105, 1
        %s463 = smul.addr %s462, 16
        %s464 = scalar_lea.vmem [#allocation7], %s463
        %p465 = pneg %p118
        %p466 = pneg %p115
        %p467 = pneg %p139
        %p468 = pneg %p136
        %p469 = pneg %p160
        %p470 = pneg %p157
        %p471 = pneg %p181
        %p472 = pneg %p178
        %p473 = pneg %p202
        %p474 = pneg %p199
        %p475 = pneg %p223
        %p476 = pneg %p220
        %p477 = pneg %p244
        %p478 = pneg %p241
        %p479 = pneg %p272
        %p480 = pneg %p269
        %s481 = sand.u32 %s259, 1
        %s482 = scalar_lea.sflag [#allocation4], %s481
        %s483 = sand.u32 %s259, 1
        %s484 = smul.addr %s483, 8
        %s485 = scalar_lea.vmem [#allocation13], %s484
        %v486 = vld [vmem:[%s420] sm:$0xff]
        %v487 = vld [vmem:[%s420 + $0x8] sm:$0xff]
        %v488 = vld [vmem:[%s411] sm:$0xff]
        %v489 = vld [vmem:[#allocation8] sm:$0xff]
        %v490 = vld [vmem:[#allocation8 + $0x8] sm:$0xff]
        %v491 = vld [vmem:[%s5] sm:$0x1]
        %v493 = vlaneseq
        %v494 = vshrl.u32 %v493, 7
        %v495 = vsub.s32 0, %v494
        %v496 = vrot.slane %v491, %v495
        %vm498 = vcmask 130048
        %v500 = vsel %vm498, %v486, 0
        %v503 = vsel %vm498, %v487, 0
        %505 = vmatprep.subr.mxu0 0.0
        %506 = vmatpush1.msra.mxu0 %v489
        %507 = vmatprep.subr.mxu0 0.0
        %508 = vmatpush1.msra.mxu0 %v490
        %509 = vmatprep.subr.mxu0 0.0
        %510 = vmatpush1.msra.mxu0 0.0
        %511 = vmatprep.subr.mxu0 0.0
        %512 = vmatpush1.msra.mxu0 0.0
        %513 = vmatprep.subr.mxu0 0.0
        %514 = vmatpush1.msra.mxu0 0.0
        %515 = vmatprep.subr.mxu0 0.0
        %516 = vmatpush1.msra.mxu0 0.0
        %517 = vmatprep.subr.mxu0 0.0
        %518 = vmatpush1.msra.mxu0 0.0
        %519 = vmatprep.subr.mxu0 0.0
        %520 = vmatpush1.msra.mxu0 0.0
        %521 = vmatprep.subr.mxu0 0.0
        %522 = vmatpush1.msra.mxu0 0.0
        %523 = vmatprep.subr.mxu0 0.0
        %524 = vmatpush1.msra.mxu0 0.0
        %525 = vmatprep.subr.mxu0 0.0
        %526 = vmatpush1.msra.mxu0 0.0
        %527 = vmatprep.subr.mxu0 0.0
        %528 = vmatpush1.msra.mxu0 0.0
        %529 = vmatprep.subr.mxu0 0.0
        %530 = vmatpush1.msra.mxu0 0.0
        %531 = vmatprep.subr.mxu0 0.0
        %532 = vmatpush1.msra.mxu0 0.0
        %533 = vmatprep.subr.mxu0 0.0
        %534 = vmatpush1.msra.mxu0 0.0
        %535 = vmatprep.subr.mxu0 0.0
        %536 = vmatpush1.msra.mxu0 0.0
        %537 = vmatprep.subr.mxu0 0.0
        %538 = vmatpush1.msra.mxu0 0.0
        %539 = vmatprep.subr.mxu0 0.0
        %540 = vmatpush1.msra.mxu0 0.0
        %541 = vmatprep.subr.mxu0 0.0
        %542 = vmatpush1.msra.mxu0 0.0
        %543 = vmatprep.subr.mxu0 0.0
        %544 = vmatpush1.msra.mxu0 0.0
        %545 = vmatprep.subr.mxu0 0.0
        %546 = vmatpush1.msra.mxu0 0.0
        %547 = vmatprep.subr.mxu0 0.0
        %548 = vmatpush1.msra.mxu0 0.0
        %549 = vmatprep.subr.mxu0 0.0
        %550 = vmatpush1.msra.mxu0 0.0
        %551 = vmatprep.subr.mxu0 0.0
        %552 = vmatpush1.msra.mxu0 0.0
        %553 = vmatprep.subr.mxu0 0.0
        %554 = vmatpush1.msra.mxu0 0.0
        %555 = vmatprep.subr.mxu0 0.0
        %556 = vmatpush1.msra.mxu0 0.0
        %557 = vmatprep.subr.mxu0 0.0
        %558 = vmatpush1.msra.mxu0 0.0
        %559 = vmatprep.subr.mxu0 0.0
        %560 = vmatpush1.msra.mxu0 0.0
        %561 = vmatprep.subr.mxu0 0.0
        %562 = vmatpush1.msra.mxu0 0.0
        %563 = vmatprep.subr.mxu0 0.0
        %564 = vmatpush1.msra.mxu0 0.0
        %565 = vmatprep.subr.mxu0 0.0
        %566 = vmatpush1.msra.mxu0 0.0
        %567 = vmatprep.subr.mxu0 0.0
        %568 = vmatpush1.msra.mxu0 0.0
        %569 = vmatprep.mubr.f32.mxu0 0.0
        %570 = vmatmul.mubr.f32.gmra.mrb[0].mxu0 %v500
        %v571 = vpop.f32.mrb[0].mxu0
        %v572 = vadd.f32 %v496, %v571
        %v573 = vpop.f32.mrb[0].mxu0
        %574 = vmatprep.mubr.f32.mxu0 0.0
        %575 = vmatmul.mubr.f32.gmra.mrb[0].mxu0 %v503
        %v576 = vpop.f32.mrb[0].mxu0
        %v577 = vadd.f32 %v496, %v576
        %v578 = vpop.f32.mrb[0].mxu0
        %579 = vdwg.mxu0
        %v580 = vld [vmem:[#allocation10] sm:$0xff]
        %v581 = vld [vmem:[#allocation10 + $0x8] sm:$0xff]
        %v582 = vld [vmem:[%s6] sm:$0x1]
        %v584 = vlaneseq
        %v585 = vshrl.u32 %v584, 7
        %v586 = vsub.s32 0, %v585
        %v587 = vrot.slane %v582, %v586
        %v590 = vsel %vm498, %v488, 0
        %592 = vmatprep.subr.mxu0 0.0
        %593 = vmatpush1.msra.mxu0 %v580
        %594 = vmatprep.subr.mxu0 0.0
        %595 = vmatpush1.msra.mxu0 %v581
        %596 = vmatprep.subr.mxu0 0.0
        %597 = vmatpush1.msra.mxu0 0.0
        %598 = vmatprep.subr.mxu0 0.0
        %599 = vmatpush1.msra.mxu0 0.0
        %600 = vmatprep.subr.mxu0 0.0
        %601 = vmatpush1.msra.mxu0 0.0
        %602 = vmatprep.subr.mxu0 0.0
        %603 = vmatpush1.msra.mxu0 0.0
        %604 = vmatprep.subr.mxu0 0.0
        %605 = vmatpush1.msra.mxu0 0.0
        %606 = vmatprep.subr.mxu0 0.0
        %607 = vmatpush1.msra.mxu0 0.0
        %608 = vmatprep.subr.mxu0 0.0
        %609 = vmatpush1.msra.mxu0 0.0
        %610 = vmatprep.subr.mxu0 0.0
        %611 = vmatpush1.msra.mxu0 0.0
        %612 = vmatprep.subr.mxu0 0.0
        %613 = vmatpush1.msra.mxu0 0.0
        %614 = vmatprep.subr.mxu0 0.0
        %615 = vmatpush1.msra.mxu0 0.0
        %616 = vmatprep.subr.mxu0 0.0
        %617 = vmatpush1.msra.mxu0 0.0
        %618 = vmatprep.subr.mxu0 0.0
        %619 = vmatpush1.msra.mxu0 0.0
        %620 = vmatprep.subr.mxu0 0.0
        %621 = vmatpush1.msra.mxu0 0.0
        %622 = vmatprep.subr.mxu0 0.0
        %623 = vmatpush1.msra.mxu0 0.0
        %624 = vmatprep.subr.mxu0 0.0
        %625 = vmatpush1.msra.mxu0 0.0
        %626 = vmatprep.subr.mxu0 0.0
        %627 = vmatpush1.msra.mxu0 0.0
        %628 = vmatprep.subr.mxu0 0.0
        %629 = vmatpush1.msra.mxu0 0.0
        %630 = vmatprep.subr.mxu0 0.0
        %631 = vmatpush1.msra.mxu0 0.0
        %632 = vmatprep.subr.mxu0 0.0
        %633 = vmatpush1.msra.mxu0 0.0
        %634 = vmatprep.subr.mxu0 0.0
        %635 = vmatpush1.msra.mxu0 0.0
        %636 = vmatprep.subr.mxu0 0.0
        %637 = vmatpush1.msra.mxu0 0.0
        %638 = vmatprep.subr.mxu0 0.0
        %639 = vmatpush1.msra.mxu0 0.0
        %640 = vmatprep.subr.mxu0 0.0
        %641 = vmatpush1.msra.mxu0 0.0
        %642 = vmatprep.subr.mxu0 0.0
        %643 = vmatpush1.msra.mxu0 0.0
        %644 = vmatprep.subr.mxu0 0.0
        %645 = vmatpush1.msra.mxu0 0.0
        %646 = vmatprep.subr.mxu0 0.0
        %647 = vmatpush1.msra.mxu0 0.0
        %648 = vmatprep.subr.mxu0 0.0
        %649 = vmatpush1.msra.mxu0 0.0
        %650 = vmatprep.subr.mxu0 0.0
        %651 = vmatpush1.msra.mxu0 0.0
        %652 = vmatprep.subr.mxu0 0.0
        %653 = vmatpush1.msra.mxu0 0.0
        %654 = vmatprep.subr.mxu0 0.0
        %655 = vmatpush1.msra.mxu0 0.0
        %656 = vmatprep.mubr.f32.mxu0 0.0
        %657 = vmatmul.mubr.f32.gmra.mrb[0].mxu0 %v590
        %v658 = vpop.f32.mrb[0].mxu0
        %v659 = vadd.f32 %v587, %v658
        %v660 = vpop.f32.mrb[0].mxu0
        %661 = vdwg.mxu0
        %v662 = vld [vmem:[%s429] sm:$0xff]
        %v663 = vld [vmem:[%s429 + $0x8] sm:$0xff]
        %vm664 = vcmask 64512
        %v666 = vsel %vm664, %v659, 0
        %v669 = vsel %vm664, %v572, 0
        %v672 = vsel %vm664, %v577, 0
        %674 = vmatprep.subr.mxu0 0.0
        %675 = vmatpush1.xpose.msra.mxu0 %v669
        %676 = vmatprep.subr.mxu0 0.0
        %677 = vmatpush1.xpose.msra.mxu0 %v672
        %678 = vmatprep.subr.mxu0 0.0
        %679 = vmatpush1.xpose.msra.mxu0 0.0
        %680 = vmatprep.subr.mxu0 0.0
        %681 = vmatpush1.xpose.msra.mxu0 0.0
        %682 = vmatprep.subr.mxu0 0.0
        %683 = vmatpush1.xpose.msra.mxu0 0.0
        %684 = vmatprep.subr.mxu0 0.0
        %685 = vmatpush1.xpose.msra.mxu0 0.0
        %686 = vmatprep.subr.mxu0 0.0
        %687 = vmatpush1.xpose.msra.mxu0 0.0
        %688 = vmatprep.subr.mxu0 0.0
        %689 = vmatpush1.xpose.msra.mxu0 0.0
        %690 = vmatprep.subr.mxu0 0.0
        %691 = vmatpush1.xpose.msra.mxu0 0.0
        %692 = vmatprep.subr.mxu0 0.0
        %693 = vmatpush1.xpose.msra.mxu0 0.0
        %694 = vmatprep.subr.mxu0 0.0
        %695 = vmatpush1.xpose.msra.mxu0 0.0
        %696 = vmatprep.subr.mxu0 0.0
        %697 = vmatpush1.xpose.msra.mxu0 0.0
        %698 = vmatprep.subr.mxu0 0.0
        %699 = vmatpush1.xpose.msra.mxu0 0.0
        %700 = vmatprep.subr.mxu0 0.0
        %701 = vmatpush1.xpose.msra.mxu0 0.0
        %702 = vmatprep.subr.mxu0 0.0
        %703 = vmatpush1.xpose.msra.mxu0 0.0
        %704 = vmatprep.subr.mxu0 0.0
        %705 = vmatpush1.xpose.msra.mxu0 0.0
        %706 = vmatprep.subr.mxu0 0.0
        %707 = vmatpush1.xpose.msra.mxu0 0.0
        %708 = vmatprep.subr.mxu0 0.0
        %709 = vmatpush1.xpose.msra.mxu0 0.0
        %710 = vmatprep.subr.mxu0 0.0
        %711 = vmatpush1.xpose.msra.mxu0 0.0
        %712 = vmatprep.subr.mxu0 0.0
        %713 = vmatpush1.xpose.msra.mxu0 0.0
        %714 = vmatprep.subr.mxu0 0.0
        %715 = vmatpush1.xpose.msra.mxu0 0.0
        %716 = vmatprep.subr.mxu0 0.0
        %717 = vmatpush1.xpose.msra.mxu0 0.0
        %718 = vmatprep.subr.mxu0 0.0
        %719 = vmatpush1.xpose.msra.mxu0 0.0
        %720 = vmatprep.subr.mxu0 0.0
        %721 = vmatpush1.xpose.msra.mxu0 0.0
        %722 = vmatprep.subr.mxu0 0.0
        %723 = vmatpush1.xpose.msra.mxu0 0.0
        %724 = vmatprep.subr.mxu0 0.0
        %725 = vmatpush1.xpose.msra.mxu0 0.0
        %726 = vmatprep.subr.mxu0 0.0
        %727 = vmatpush1.xpose.msra.mxu0 0.0
        %728 = vmatprep.subr.mxu0 0.0
        %729 = vmatpush1.xpose.msra.mxu0 0.0
        %730 = vmatprep.subr.mxu0 0.0
        %731 = vmatpush1.xpose.msra.mxu0 0.0
        %732 = vmatprep.subr.mxu0 0.0
        %733 = vmatpush1.xpose.msra.mxu0 0.0
        %734 = vmatprep.subr.mxu0 0.0
        %735 = vmatpush1.xpose.msra.mxu0 0.0
        %736 = vmatprep.subr.mxu0 0.0
        %737 = vmatpush1.xpose.msra.mxu0 0.0
        %738 = vmatprep.mubr.f32.mxu0 0.0
        %739 = vmatmul.mubr.f32.gmra.mrb[0].mxu0 %v666
        %v740 = vpop.f32.mrb[0].mxu0
        %v741 = vadd.f32 0.0, %v740
        %v742 = vpop.f32.mrb[0].mxu0
        %743 = vdwg.mxu0
        %v744 = vsel %vm498, %v741, -inf
        %745 = vmax.xlane.f32.xlu0 %v744
        %v746 = vpop.xlane.xlu0 %745
        %v747 = vsub.f32 %v741, %v746
        %v748 = vmul.f32 %v747, 1.442695
        %v749 = vpow.pop %v748
        %v750 = vsel %vm498, %v749, 0.0
        %751 = vadd.xlane.f32.xlu0 %v750
        %v752 = vpop.xlane.xlu0 %751
        %v754 = vsel %vm498, %v749, 0
        %756 = vmatprep.subr.mxu0 0.0
        %757 = vmatpush1.msra.mxu0 %v662
        %758 = vmatprep.subr.mxu0 0.0
        %759 = vmatpush1.msra.mxu0 %v663
        %760 = vmatprep.subr.mxu0 0.0
        %761 = vmatpush1.msra.mxu0 0.0
        %762 = vmatprep.subr.mxu0 0.0
        %763 = vmatpush1.msra.mxu0 0.0
        %764 = vmatprep.subr.mxu0 0.0
        %765 = vmatpush1.msra.mxu0 0.0
        %766 = vmatprep.subr.mxu0 0.0
        %767 = vmatpush1.msra.mxu0 0.0
        %768 = vmatprep.subr.mxu0 0.0
        %769 = vmatpush1.msra.mxu0 0.0
        %770 = vmatprep.subr.mxu0 0.0
        %771 = vmatpush1.msra.mxu0 0.0
        %772 = vmatprep.subr.mxu0 0.0
        %773 = vmatpush1.msra.mxu0 0.0
        %774 = vmatprep.subr.mxu0 0.0
        %775 = vmatpush1.msra.mxu0 0.0
        %776 = vmatprep.subr.mxu0 0.0
        %777 = vmatpush1.msra.mxu0 0.0
        %778 = vmatprep.subr.mxu0 0.0
        %779 = vmatpush1.msra.mxu0 0.0
        %780 = vmatprep.subr.mxu0 0.0
        %781 = vmatpush1.msra.mxu0 0.0
        %782 = vmatprep.subr.mxu0 0.0
        %783 = vmatpush1.msra.mxu0 0.0
        %784 = vmatprep.subr.mxu0 0.0
        %785 = vmatpush1.msra.mxu0 0.0
        %786 = vmatprep.subr.mxu0 0.0
        %787 = vmatpush1.msra.mxu0 0.0
        %788 = vmatprep.subr.mxu0 0.0
        %789 = vmatpush1.msra.mxu0 0.0
        %790 = vmatprep.subr.mxu0 0.0
        %791 = vmatpush1.msra.mxu0 0.0
        %792 = vmatprep.subr.mxu0 0.0
        %793 = vmatpush1.msra.mxu0 0.0
        %794 = vmatprep.subr.mxu0 0.0
        %795 = vmatpush1.msra.mxu0 0.0
        %796 = vmatprep.subr.mxu0 0.0
        %797 = vmatpush1.msra.mxu0 0.0
        %798 = vmatprep.subr.mxu0 0.0
        %799 = vmatpush1.msra.mxu0 0.0
        %800 = vmatprep.subr.mxu0 0.0
        %801 = vmatpush1.msra.mxu0 0.0
        %802 = vmatprep.subr.mxu0 0.0
        %803 = vmatpush1.msra.mxu0 0.0
        %804 = vmatprep.subr.mxu0 0.0
        %805 = vmatpush1.msra.mxu0 0.0
        %806 = vmatprep.subr.mxu0 0.0
        %807 = vmatpush1.msra.mxu0 0.0
        %808 = vmatprep.subr.mxu0 0.0
        %809 = vmatpush1.msra.mxu0 0.0
        %810 = vmatprep.subr.mxu0 0.0
        %811 = vmatpush1.msra.mxu0 0.0
        %812 = vmatprep.subr.mxu0 0.0
        %813 = vmatpush1.msra.mxu0 0.0
        %814 = vmatprep.subr.mxu0 0.0
        %815 = vmatpush1.msra.mxu0 0.0
        %816 = vmatprep.subr.mxu0 0.0
        %817 = vmatpush1.msra.mxu0 0.0
        %818 = vmatprep.subr.mxu0 0.0
        %819 = vmatpush1.msra.mxu0 0.0
        %820 = vmatprep.mubr.f32.mxu0 0.0
        %821 = vmatmul.mubr.f32.gmra.mrb[0].mxu0 %v754
        %v822 = vpop.f32.mrb[0].mxu0
        %v823 = vadd.f32 0.0, %v822
        %v824 = vpop.f32.mrb[0].mxu0
        %825 = vdwg.mxu0
        %v826 = vrcp.pop %v752
        %v827 = vmul.f32 %v823, %v826
        %v828 = vld [vmem:[#allocation11] sm:$0xff]
        %v829 = vld [vmem:[#allocation11 + $0x8] sm:$0xff]
        %830 = vrot.lane.b32.xlu0 %v659, 120
        %v831 = vpop.permute.xlu0 %830
        %832 = vrot.lane.b32.xlu0 %v572, 120
        %v833 = vpop.permute.xlu0 %832
        %834 = vrot.lane.b32.xlu0 %v577, 120
        %v835 = vpop.permute.xlu0 %834
        %v836 = vsel %vm664, %v831, 0
        %v838 = vsel %vm664, %v833, 0
        %v840 = vsel %vm664, %v835, 0
        %842 = vmatprep.subr.mxu0 0.0
        %843 = vmatpush1.xpose.msra.mxu0 %v838
        %844 = vmatprep.subr.mxu0 0.0
        %845 = vmatpush1.xpose.msra.mxu0 %v840
        %846 = vmatprep.subr.mxu0 0.0
        %847 = vmatpush1.xpose.msra.mxu0 0.0
        %848 = vmatprep.subr.mxu0 0.0
        %849 = vmatpush1.xpose.msra.mxu0 0.0
        %850 = vmatprep.subr.mxu0 0.0
        %851 = vmatpush1.xpose.msra.mxu0 0.0
        %852 = vmatprep.subr.mxu0 0.0
        %853 = vmatpush1.xpose.msra.mxu0 0.0
        %854 = vmatprep.subr.mxu0 0.0
        %855 = vmatpush1.xpose.msra.mxu0 0.0
        %856 = vmatprep.subr.mxu0 0.0
        %857 = vmatpush1.xpose.msra.mxu0 0.0
        %858 = vmatprep.subr.mxu0 0.0
        %859 = vmatpush1.xpose.msra.mxu0 0.0
        %860 = vmatprep.subr.mxu0 0.0
        %861 = vmatpush1.xpose.msra.mxu0 0.0
        %862 = vmatprep.subr.mxu0 0.0
        %863 = vmatpush1.xpose.msra.mxu0 0.0
        %864 = vmatprep.subr.mxu0 0.0
        %865 = vmatpush1.xpose.msra.mxu0 0.0
        %866 = vmatprep.subr.mxu0 0.0
        %867 = vmatpush1.xpose.msra.mxu0 0.0
        %868 = vmatprep.subr.mxu0 0.0
        %869 = vmatpush1.xpose.msra.mxu0 0.0
        %870 = vmatprep.subr.mxu0 0.0
        %871 = vmatpush1.xpose.msra.mxu0 0.0
        %872 = vmatprep.subr.mxu0 0.0
        %873 = vmatpush1.xpose.msra.mxu0 0.0
        %874 = vmatprep.subr.mxu0 0.0
        %875 = vmatpush1.xpose.msra.mxu0 0.0
        %876 = vmatprep.subr.mxu0 0.0
        %877 = vmatpush1.xpose.msra.mxu0 0.0
        %878 = vmatprep.subr.mxu0 0.0
        %879 = vmatpush1.xpose.msra.mxu0 0.0
        %880 = vmatprep.subr.mxu0 0.0
        %881 = vmatpush1.xpose.msra.mxu0 0.0
        %882 = vmatprep.subr.mxu0 0.0
        %883 = vmatpush1.xpose.msra.mxu0 0.0
        %884 = vmatprep.subr.mxu0 0.0
        %885 = vmatpush1.xpose.msra.mxu0 0.0
        %886 = vmatprep.subr.mxu0 0.0
        %887 = vmatpush1.xpose.msra.mxu0 0.0
        %888 = vmatprep.subr.mxu0 0.0
        %889 = vmatpush1.xpose.msra.mxu0 0.0
        %890 = vmatprep.subr.mxu0 0.0
        %891 = vmatpush1.xpose.msra.mxu0 0.0
        %892 = vmatprep.subr.mxu0 0.0
        %893 = vmatpush1.xpose.msra.mxu0 0.0
        %894 = vmatprep.subr.mxu0 0.0
        %895 = vmatpush1.xpose.msra.mxu0 0.0
        %896 = vmatprep.subr.mxu0 0.0
        %897 = vmatpush1.xpose.msra.mxu0 0.0
        %898 = vmatprep.subr.mxu0 0.0
        %899 = vmatpush1.xpose.msra.mxu0 0.0
        %900 = vmatprep.subr.mxu0 0.0
        %901 = vmatpush1.xpose.msra.mxu0 0.0
        %902 = vmatprep.subr.mxu0 0.0
        %903 = vmatpush1.xpose.msra.mxu0 0.0
        %904 = vmatprep.subr.mxu0 0.0
        %905 = vmatpush1.xpose.msra.mxu0 0.0
        %906 = vmatprep.mubr.f32.mxu0 0.0
        %907 = vmatmul.mubr.f32.gmra.mrb[0].mxu0 %v836
        %v908 = vpop.f32.mrb[0].mxu0
        %v909 = vadd.f32 0.0, %v908
        %v910 = vpop.f32.mrb[0].mxu0
        %911 = vdwg.mxu0
        %v912 = vsel %vm498, %v909, -inf
        %913 = vmax.xlane.f32.xlu0 %v912
        %v914 = vpop.xlane.xlu0 %913
        %v915 = vsub.f32 %v909, %v914
        %v916 = vmul.f32 %v915, 1.442695
        %v917 = vpow.pop %v916
        %v918 = vsel %vm498, %v917, 0.0
        %919 = vadd.xlane.f32.xlu0 %v918
        %v920 = vpop.xlane.xlu0 %919
        %v922 = vsel %vm498, %v917, 0
        %924 = vmatprep.subr.mxu0 0.0
        %925 = vmatpush1.msra.mxu0 %v662
        %926 = vmatprep.subr.mxu0 0.0
        %927 = vmatpush1.msra.mxu0 %v663
        %928 = vmatprep.subr.mxu0 0.0
        %929 = vmatpush1.msra.mxu0 0.0
        %930 = vmatprep.subr.mxu0 0.0
        %931 = vmatpush1.msra.mxu0 0.0
        %932 = vmatprep.subr.mxu0 0.0
        %933 = vmatpush1.msra.mxu0 0.0
        %934 = vmatprep.subr.mxu0 0.0
        %935 = vmatpush1.msra.mxu0 0.0
        %936 = vmatprep.subr.mxu0 0.0
        %937 = vmatpush1.msra.mxu0 0.0
        %938 = vmatprep.subr.mxu0 0.0
        %939 = vmatpush1.msra.mxu0 0.0
        %940 = vmatprep.subr.mxu0 0.0
        %941 = vmatpush1.msra.mxu0 0.0
        %942 = vmatprep.subr.mxu0 0.0
        %943 = vmatpush1.msra.mxu0 0.0
        %944 = vmatprep.subr.mxu0 0.0
        %945 = vmatpush1.msra.mxu0 0.0
        %946 = vmatprep.subr.mxu0 0.0
        %947 = vmatpush1.msra.mxu0 0.0
        %948 = vmatprep.subr.mxu0 0.0
        %949 = vmatpush1.msra.mxu0 0.0
        %950 = vmatprep.subr.mxu0 0.0
        %951 = vmatpush1.msra.mxu0 0.0
        %952 = vmatprep.subr.mxu0 0.0
        %953 = vmatpush1.msra.mxu0 0.0
        %954 = vmatprep.subr.mxu0 0.0
        %955 = vmatpush1.msra.mxu0 0.0
        %956 = vmatprep.subr.mxu0 0.0
        %957 = vmatpush1.msra.mxu0 0.0
        %958 = vmatprep.subr.mxu0 0.0
        %959 = vmatpush1.msra.mxu0 0.0
        %960 = vmatprep.subr.mxu0 0.0
        %961 = vmatpush1.msra.mxu0 0.0
        %962 = vmatprep.subr.mxu0 0.0
        %963 = vmatpush1.msra.mxu0 0.0
        %964 = vmatprep.subr.mxu0 0.0
        %965 = vmatpush1.msra.mxu0 0.0
        %966 = vmatprep.subr.mxu0 0.0
        %967 = vmatpush1.msra.mxu0 0.0
        %968 = vmatprep.subr.mxu0 0.0
        %969 = vmatpush1.msra.mxu0 0.0
        %970 = vmatprep.subr.mxu0 0.0
        %971 = vmatpush1.msra.mxu0 0.0
        %972 = vmatprep.subr.mxu0 0.0
        %973 = vmatpush1.msra.mxu0 0.0
        %974 = vmatprep.subr.mxu0 0.0
        %975 = vmatpush1.msra.mxu0 0.0
        %976 = vmatprep.subr.mxu0 0.0
        %977 = vmatpush1.msra.mxu0 0.0
        %978 = vmatprep.subr.mxu0 0.0
        %979 = vmatpush1.msra.mxu0 0.0
        %980 = vmatprep.subr.mxu0 0.0
        %981 = vmatpush1.msra.mxu0 0.0
        %982 = vmatprep.subr.mxu0 0.0
        %983 = vmatpush1.msra.mxu0 0.0
        %984 = vmatprep.subr.mxu0 0.0
        %985 = vmatpush1.msra.mxu0 0.0
        %986 = vmatprep.subr.mxu0 0.0
        %987 = vmatpush1.msra.mxu0 0.0
        %988 = vmatprep.mubr.f32.mxu0 0.0
        %989 = vmatmul.mubr.f32.gmra.mrb[0].mxu0 %v922
        %v990 = vpop.f32.mrb[0].mxu0
        %v991 = vadd.f32 0.0, %v990
        %v992 = vpop.f32.mrb[0].mxu0
        %993 = vdwg.mxu0
        %v994 = vrcp.pop %v920
        %v995 = vmul.f32 %v991, %v994
        %s996 = scalar_lea.vmem [#allocation11], 16
        %v997 = vld [vmem:[%s996] sm:$0xff]
        %v998 = vld [vmem:[%s996 + $0x8] sm:$0xff]
        %v1000 = vsel %vm498, %v995, 0
        %1002 = vmatprep.subr.mxu0 0.0
        %1003 = vmatpush1.msra.mxu0 %v997
        %1004 = vmatprep.subr.mxu0 0.0
        %1005 = vmatpush1.msra.mxu0 %v998
        %1006 = vmatprep.subr.mxu0 0.0
        %1007 = vmatpush1.msra.mxu0 0.0
        %1008 = vmatprep.subr.mxu0 0.0
        %1009 = vmatpush1.msra.mxu0 0.0
        %1010 = vmatprep.subr.mxu0 0.0
        %1011 = vmatpush1.msra.mxu0 0.0
        %1012 = vmatprep.subr.mxu0 0.0
        %1013 = vmatpush1.msra.mxu0 0.0
        %1014 = vmatprep.subr.mxu0 0.0
        %1015 = vmatpush1.msra.mxu0 0.0
        %1016 = vmatprep.subr.mxu0 0.0
        %1017 = vmatpush1.msra.mxu0 0.0
        %1018 = vmatprep.subr.mxu0 0.0
        %1019 = vmatpush1.msra.mxu0 0.0
        %1020 = vmatprep.subr.mxu0 0.0
        %1021 = vmatpush1.msra.mxu0 0.0
        %1022 = vmatprep.subr.mxu0 0.0
        %1023 = vmatpush1.msra.mxu0 0.0
        %1024 = vmatprep.subr.mxu0 0.0
        %1025 = vmatpush1.msra.mxu0 0.0
        %1026 = vmatprep.subr.mxu0 0.0
        %1027 = vmatpush1.msra.mxu0 0.0
        %1028 = vmatprep.subr.mxu0 0.0
        %1029 = vmatpush1.msra.mxu0 0.0
        %1030 = vmatprep.subr.mxu0 0.0
        %1031 = vmatpush1.msra.mxu0 0.0
        %1032 = vmatprep.subr.mxu0 0.0
        %1033 = vmatpush1.msra.mxu0 0.0
        %1034 = vmatprep.subr.mxu0 0.0
        %1035 = vmatpush1.msra.mxu0 0.0
        %1036 = vmatprep.subr.mxu0 0.0
        %1037 = vmatpush1.msra.mxu0 0.0
        %1038 = vmatprep.subr.mxu0 0.0
        %1039 = vmatpush1.msra.mxu0 0.0
        %1040 = vmatprep.subr.mxu0 0.0
        %1041 = vmatpush1.msra.mxu0 0.0
        %1042 = vmatprep.subr.mxu0 0.0
        %1043 = vmatpush1.msra.mxu0 0.0
        %1044 = vmatprep.subr.mxu0 0.0
        %1045 = vmatpush1.msra.mxu0 0.0
        %1046 = vmatprep.subr.mxu0 0.0
        %1047 = vmatpush1.msra.mxu0 0.0
        %1048 = vmatprep.subr.mxu0 0.0
        %1049 = vmatpush1.msra.mxu0 0.0
        %1050 = vmatprep.subr.mxu0 0.0
        %1051 = vmatpush1.msra.mxu0 0.0
        %1052 = vmatprep.subr.mxu0 0.0
        %1053 = vmatpush1.msra.mxu0 0.0
        %1054 = vmatprep.subr.mxu0 0.0
        %1055 = vmatpush1.msra.mxu0 0.0
        %1056 = vmatprep.subr.mxu0 0.0
        %1057 = vmatpush1.msra.mxu0 0.0
        %1058 = vmatprep.subr.mxu0 0.0
        %1059 = vmatpush1.msra.mxu0 0.0
        %1060 = vmatprep.subr.mxu0 0.0
        %1061 = vmatpush1.msra.mxu0 0.0
        %1062 = vmatprep.subr.mxu0 0.0
        %1063 = vmatpush1.msra.mxu0 0.0
        %1064 = vmatprep.subr.mxu0 0.0
        %1065 = vmatpush1.msra.mxu0 0.0
        %1066 = vmatprep.mubr.f32.mxu0 0.0
        %1067 = vmatmul.mubr.f32.gmra.mrb[0].mxu0 %v1000
        %v1068 = vpop.f32.mrb[0].mxu0
        %v1069 = vadd.f32 0.0, %v1068
        %v1070 = vpop.f32.mrb[0].mxu0
        %1071 = vdwg.mxu0
        %v1073 = vsel %vm498, %v827, 0
        %1075 = vmatprep.subr.mxu0 0.0
        %1076 = vmatpush1.msra.mxu0 %v828
        %1077 = vmatprep.subr.mxu0 0.0
        %1078 = vmatpush1.msra.mxu0 %v829
        %1079 = vmatprep.subr.mxu0 0.0
        %1080 = vmatpush1.msra.mxu0 0.0
        %1081 = vmatprep.subr.mxu0 0.0
        %1082 = vmatpush1.msra.mxu0 0.0
        %1083 = vmatprep.subr.mxu0 0.0
        %1084 = vmatpush1.msra.mxu0 0.0
        %1085 = vmatprep.subr.mxu0 0.0
        %1086 = vmatpush1.msra.mxu0 0.0
        %1087 = vmatprep.subr.mxu0 0.0
        %1088 = vmatpush1.msra.mxu0 0.0
        %1089 = vmatprep.subr.mxu0 0.0
        %1090 = vmatpush1.msra.mxu0 0.0
        %1091 = vmatprep.subr.mxu0 0.0
        %1092 = vmatpush1.msra.mxu0 0.0
        %1093 = vmatprep.subr.mxu0 0.0
        %1094 = vmatpush1.msra.mxu0 0.0
        %1095 = vmatprep.subr.mxu0 0.0
        %1096 = vmatpush1.msra.mxu0 0.0
        %1097 = vmatprep.subr.mxu0 0.0
        %1098 = vmatpush1.msra.mxu0 0.0
        %1099 = vmatprep.subr.mxu0 0.0
        %1100 = vmatpush1.msra.mxu0 0.0
        %1101 = vmatprep.subr.mxu0 0.0
        %1102 = vmatpush1.msra.mxu0 0.0
        %1103 = vmatprep.subr.mxu0 0.0
        %1104 = vmatpush1.msra.mxu0 0.0
        %1105 = vmatprep.subr.mxu0 0.0
        %1106 = vmatpush1.msra.mxu0 0.0
        %1107 = vmatprep.subr.mxu0 0.0
        %1108 = vmatpush1.msra.mxu0 0.0
        %1109 = vmatprep.subr.mxu0 0.0
        %1110 = vmatpush1.msra.mxu0 0.0
        %1111 = vmatprep.subr.mxu0 0.0
        %1112 = vmatpush1.msra.mxu0 0.0
        %1113 = vmatprep.subr.mxu0 0.0
        %1114 = vmatpush1.msra.mxu0 0.0
        %1115 = vmatprep.subr.mxu0 0.0
        %1116 = vmatpush1.msra.mxu0 0.0
        %1117 = vmatprep.subr.mxu0 0.0
        %1118 = vmatpush1.msra.mxu0 0.0
        %1119 = vmatprep.subr.mxu0 0.0
        %1120 = vmatpush1.msra.mxu0 0.0
        %1121 = vmatprep.subr.mxu0 0.0
        %1122 = vmatpush1.msra.mxu0 0.0
        %1123 = vmatprep.subr.mxu0 0.0
        %1124 = vmatpush1.msra.mxu0 0.0
        %1125 = vmatprep.subr.mxu0 0.0
        %1126 = vmatpush1.msra.mxu0 0.0
        %1127 = vmatprep.subr.mxu0 0.0
        %1128 = vmatpush1.msra.mxu0 0.0
        %1129 = vmatprep.subr.mxu0 0.0
        %1130 = vmatpush1.msra.mxu0 0.0
        %1131 = vmatprep.subr.mxu0 0.0
        %1132 = vmatpush1.msra.mxu0 0.0
        %1133 = vmatprep.subr.mxu0 0.0
        %1134 = vmatpush1.msra.mxu0 0.0
        %1135 = vmatprep.subr.mxu0 0.0
        %1136 = vmatpush1.msra.mxu0 0.0
        %1137 = vmatprep.subr.mxu0 0.0
        %1138 = vmatpush1.msra.mxu0 0.0
        %1139 = vmatprep.mubr.f32.mxu0 0.0
        %1140 = vmatmul.mubr.f32.gmra.mrb[0].mxu0 %v1073
        %v1141 = vpop.f32.mrb[0].mxu0
        %v1142 = vadd.f32 %v1069, %v1141
        %v1143 = vpop.f32.mrb[0].mxu0
        %1144 = vdwg.mxu0
        %v1145 = vld [vmem:[%s8] sm:$0x1]
        %v1147 = vlaneseq
        %v1148 = vshrl.u32 %v1147, 7
        %v1149 = vsub.s32 0, %v1148
        %v1150 = vrot.slane %v1145, %v1149
        %v1152 = vadd.f32 %v1142, %v1150
        %vm1153 = vcmask 261120
        %1154 = vst.msk [vmem:[%s485] sm:$0xff] %vm1153, %v1152
        %s1155 = sand.u32 %s259, 1
        %s1156 = scalar_lea.sflag [#allocation4], %s1155
        %s1157 = sand.u32 %s259, 1
        %s1158 = smul.addr %s1157, 8
        %s1159 = scalar_lea.vmem [#allocation13], %s1158
        // Predicated region
        $region81: #{tpu_custom_call.1} parent=55 // pred_check
          %p1160 = pneg %p269
        $region82: #{tpu_custom_call.1} parent=55 // pred_check_branch
          %1162 = sbr.rel (%p1160) target = $region84
        $region83: #{tpu_custom_call.1} parent=55 // pred_region
          %s1164 = ssub.s32 128, 128
          %1165 = vsyncadd %s1156, %s1164
          %s1166 = sadd.s32 %s36, %s35
          %s1167 = smul.addr %s1166, 128
          %s1168 = scalar_lea.hbm %s9, %s1167
          %s1170 = sshll.u32 %s1159, 4
          %s1171 = int_to_ptr.vmem [resolvable:$true] %s1170
          %1173 = dma.vmem_to_hbm [thread:$0]  %s1171, 128, %s1168, %s1156
        $region84: #{tpu_custom_call.1} parent=55 // pred_fallthru
          _
      $region56: #{tpu_custom_call.1} parent=5 // pred_fallthru
        _
      %p1174 = scmp.le.s32.totalorder 2, %s26
      // Predicated region
      $region85: #{tpu_custom_call.1} parent=5 // pred_check
        %p1175 = pneg %p1174
      $region86: #{tpu_custom_call.1} parent=5 // pred_check_branch
        %1177 = sbr.rel (%p1175) target = $region88
      $region87: #{tpu_custom_call.1} parent=5 // pred_region
        %s1178 = ssub.s32 %s26, 2
        // Predicated region
        $region89: #{tpu_custom_call.1} parent=87 // pred_check
          %p1179 = pneg %p275
        $region90: #{tpu_custom_call.1} parent=87 // pred_check_branch
          %1181 = sbr.rel (%p1179) target = $region92
        $region91: #{tpu_custom_call.1} parent=87 // pred_region
          %s1182 = sand.u32 %s260, 1
          %s1183 = scalar_lea.sflag [#allocation4], %s1182
          %s1184 = sand.u32 %s260, 1
          %s1185 = smul.addr %s1184, 8
          %s1186 = scalar_lea.vmem [#allocation13], %s1185
          %1187 = dma.done %s1183, 128
        $region92: #{tpu_custom_call.1} parent=87 // pred_fallthru
          _
      $region88: #{tpu_custom_call.1} parent=5 // pred_fallthru
        _
    $region6: #{tpu_custom_call.1} parent=1 // loop_footer
      %s30 = sadd.s32 1, %s26
    $region7: #{tpu_custom_call.1} parent=1 // loop_footer_branch
      %25 = sbr.rel target = $region3
    $region8: #{tpu_custom_call.1} parent=1 // loop_exit
      _
    %1188 = vsyncpa [#allocation3], 1
    %s1189 = scalar_lea.sflag [#allocation3], 1
    %1190 = vsyncpa %s1189, 1
    %1191 = vsyncpa [#allocation6], 1
    %s1192 = scalar_lea.sflag [#allocation6], 1
    %1193 = vsyncpa %s1192, 1
    %1194 = vsyncpa [#allocation9], 1
    %1195 = vsyncpa [#allocation12], 1
    %1196 = vsyncpa [#allocation4], 1
    %s1197 = scalar_lea.sflag [#allocation4], 1
    %1198 = vsyncpa %s1197, 1

</llo_original>
